<compile_context>
chip_gen: v7x
topology: tpu7x:2x2x1
jax: 0.10.0
libtpu: 0.0.40
codegen_flags: <defaults>
</compile_context>

<pallas_src>
import functools

import jax
import jax.numpy as jnp
from jax.experimental import pallas as pl
from jax.experimental.pallas import tpu as pltpu

CONVOLUTIONAL_FILTERS = 64
BLOCKS = 9
BN_EPS = 1e-5

# Gate: bf16 matmul operands (f32 accumulation) help v6e/v7x MXU throughput but change numerics
# slightly vs. the f32 PyTorch reference, so default off.
USE_BF16_MATMUL = False


def residual_block_kernel(x_ref, w1_ref, b1_ref, w2_ref, b2_ref, o_ref,
                          pad_ref, col_ref, *, use_bf16):
    """One (batch-block, layer) grid step of the fused residual block.

    x_ref  : (1, H, W, C)  original input block (resident across the layer axis; also the skip)
    w*_ref : (1, 9*C, C)   conv weights for this layer, BN folded, im2col-ordered
    b*_ref : (1, 1, C)     conv bias for this layer, BN folded
    o_ref  : (1, H, W, C)  output block (written only at the last layer step)
    pad_ref: (1, H+2, W+2, C) persistent padded activation (halo stays zero)
    col_ref: (H*W, 9*C)    im2col patch scratch
    """
    _, H, W, C = x_ref.shape
    layer = pl.program_id(1)

    @pl.when(layer == 0)
    def _init():
        # Zero once per batch block; only the 1-pixel halo ever needs to be zero and the
        # interior is always fully overwritten below, so this never runs again.
        pad_ref[...] = jnp.zeros_like(pad_ref)
        pad_ref[:, 1:H + 1, 1:W + 1, :] = x_ref[...]

    def conv3x3_bn_relu(w_ref, b_ref):
        # im2col: gather the 9 shifted windows once, then a single big-K MXU matmul.
        for dy in range(3):
            for dx in range(3):
                t = dy * 3 + dx
                col_ref[:, t * C:(t + 1) * C] = (
                    pad_ref[:, dy:dy + H, dx:dx + W, :].reshape(H * W, C))
        cols = col_ref[...]
        w = w_ref[0]
        if use_bf16:
            cols = cols.astype(jnp.bfloat16)
            w = w.astype(jnp.bfloat16)
        acc = jnp.dot(cols, w, preferred_element_type=jnp.float32)   # (H*W, C)
        return jnp.maximum(acc + b_ref[0], 0.0)

    h1 = conv3x3_bn_relu(w1_ref, b1_ref)
    pad_ref[:, 1:H + 1, 1:W + 1, :] = h1.reshape(1, H, W, C)
    h2 = conv3x3_bn_relu(w2_ref, b2_ref)

    # Residual semantics: add the ORIGINAL block input every layer, then ReLU.
    out = jnp.maximum(h2.reshape(1, H, W, C) + x_ref[...], 0.0)
    pad_ref[:, 1:H + 1, 1:W + 1, :] = out   # activation for the next layer step

    @pl.when(layer == pl.num_programs(1) - 1)
    def _finalize():
        o_ref[...] = out.astype(o_ref.dtype)


def residual_block_forward(x_nchw, w1s, b1s, w2s, b2s, *, use_bf16_matmul=USE_BF16_MATMUL):
    """x_nchw: (N, C, H, W) f32 -> (N, C, H, W) f32. Matches ResidualBlock.forward (eval-mode BN)."""
    x = jnp.transpose(x_nchw, (0, 2, 3, 1)).astype(jnp.float32)   # NCHW -> NHWC
    N, H, W, C = x.shape
    blocks = w1s.shape[0]

    kernel = functools.partial(residual_block_kernel, use_bf16=use_bf16_matmul)

    out = pl.pallas_call(
        kernel,
        out_shape=jax.ShapeDtypeStruct((N, H, W, C), jnp.float32),
        grid_spec=pltpu.PrefetchScalarGridSpec(
            num_scalar_prefetch=0,
            grid=(N, blocks),                        # batch (parallel) x layers (arbitrary)
            in_specs=[
                pl.BlockSpec((1, H, W, C), lambda n, l: (n, 0, 0, 0)),   # x / skip (resident)
                pl.BlockSpec((1, 9 * C, C), lambda n, l: (l, 0, 0)),     # w1 (pipelined per layer)
                pl.BlockSpec((1, 1, C), lambda n, l: (l, 0, 0)),         # b1
                pl.BlockSpec((1, 9 * C, C), lambda n, l: (l, 0, 0)),     # w2
                pl.BlockSpec((1, 1, C), lambda n, l: (l, 0, 0)),         # b2
            ],
            out_specs=pl.BlockSpec((1, H, W, C), lambda n, l: (n, 0, 0, 0)),
            scratch_shapes=[
                pltpu.VMEM((1, H + 2, W + 2, C), jnp.float32),   # padded activation
                pltpu.VMEM((H * W, 9 * C), jnp.float32),         # im2col patches
            ],
        ),
        compiler_params=pltpu.CompilerParams(
            dimension_semantics=("parallel", "arbitrary")),
    )(x, w1s, b1s, w2s, b2s)

    return jnp.transpose(out, (0, 3, 1, 2))                       # NHWC -> NCHW


def init_stacked_params(key, blocks, c, eps=BN_EPS):
    """Deterministic synthetic params for all layers, BN folded, stacked & im2col-reshaped."""
    layer_keys = jax.random.split(key, blocks)
    w1s, b1s, w2s, b2s = [], [], [], []
    for lk in layer_keys:
        keys = jax.random.split(lk, 12)
        per_conv = []
        for i in range(2):
            k = keys[6 * i:6 * (i + 1)]
            fan_in = 9 * c
            w = jax.random.normal(k[0], (3, 3, c, c), jnp.float32) / jnp.sqrt(fan_in)
            b = 0.1 * jax.random.normal(k[1], (c,), jnp.float32)
            gamma = 1.0 + 0.1 * jax.random.normal(k[2], (c,), jnp.float32)
            beta = 0.1 * jax.random.normal(k[3], (c,), jnp.float32)
            running_mean = 0.1 * jax.random.normal(k[4], (c,), jnp.float32)
            running_var = 1.0 + 0.1 * jax.random.uniform(k[5], (c,), jnp.float32)
            scale = gamma / jnp.sqrt(running_var + eps)           # (C,) over Cout
            w_eff = (w * scale).reshape(9 * c, c)                 # (kh*kw*Cin, Cout), BN folded
            b_eff = ((b - running_mean) * scale + beta).reshape(1, c)
            per_conv.append((w_eff, b_eff))
        w1s.append(per_conv[0][0]); b1s.append(per_conv[0][1])
        w2s.append(per_conv[1][0]); b2s.append(per_conv[1][1])
    return jnp.stack(w1s), jnp.stack(b1s), jnp.stack(w2s), jnp.stack(b2s)


if __name__ == "__main__":
    key = jax.random.PRNGKey(0)
    k_x, k_p = jax.random.split(key)

    N, C, H, W = 2, CONVOLUTIONAL_FILTERS, 8, 8
    x = jax.random.normal(k_x, (N, C, H, W), jnp.float32)
    w1s, b1s, w2s, b2s = init_stacked_params(k_p, BLOCKS, C)

    fwd = jax.jit(residual_block_forward)
    out = jax.block_until_ready(fwd(x, w1s, b1s, w2s, b2s))

    assert out.shape == (N, C, H, W)
    assert bool(jnp.all(jnp.isfinite(out)))
    assert bool(jnp.all(out >= 0.0))   # final op is ReLU
    print("KERNEL_OK")
</pallas_src>

<mosaic_0001>
module attributes {stable_mosaic.version = 11 : i64} {
  func.func @residual_block_kernel(%arg0: i32, %arg1: i32, %arg2: memref<1x8x8x64xf32, #tpu.memory_space<vmem>>, %arg3: memref<1x576x64xf32, #tpu.memory_space<vmem>>, %arg4: memref<1x1x64xf32, #tpu.memory_space<vmem>>, %arg5: memref<1x576x64xf32, #tpu.memory_space<vmem>>, %arg6: memref<1x1x64xf32, #tpu.memory_space<vmem>>, %arg7: memref<1x8x8x64xf32, #tpu.memory_space<vmem>>, %arg8: memref<1x10x10x64xf32, #tpu.memory_space<vmem>>, %arg9: memref<64x576xf32, #tpu.memory_space<vmem>>) attributes {dimension_semantics = [#tpu.dimension_semantics<parallel>, #tpu.dimension_semantics<arbitrary>], iteration_bounds = array<i64: 2, 9>, scalar_prefetch = 0 : i64, scratch_operands = 2 : i64, tpu.core_type = #tpu.core_type<tc>, window_params = [{transform_indices = @transform_0, window_bounds = array<i64: 1, 8, 8, 64>}, {transform_indices = @transform_1, window_bounds = array<i64: 1, 576, 64>}, {transform_indices = @transform_2, window_bounds = array<i64: 1, 1, 64>}, {transform_indices = @transform_3, window_bounds = array<i64: 1, 576, 64>}, {transform_indices = @transform_4, window_bounds = array<i64: 1, 1, 64>}, {transform_indices = @transform_5, window_bounds = array<i64: 1, 8, 8, 64>}]} {
    %c0_i32 = arith.constant 0 : i32
    %0 = arith.cmpi eq, %arg1, %c0_i32 : i32
    %1 = arith.extui %0 : i1 to i32
    %c0_i32_0 = arith.constant 0 : i32
    %2 = arith.cmpi ne, %1, %c0_i32_0 : i32
    scf.if %2 {
      %cst_131 = arith.constant 0.000000e+00 : f32
      %88 = vector.broadcast %cst_131 : f32 to vector<1x10x10x64xf32>
      %c0_132 = arith.constant 0 : index
      %c0_133 = arith.constant 0 : index
      %c0_134 = arith.constant 0 : index
      %c0_135 = arith.constant 0 : index
      %89 = vector.load %arg8[%c0_132, %c0_133, %c0_134, %c0_135] : memref<1x10x10x64xf32, #tpu.memory_space<vmem>>, vector<1x10x10x64xf32>
      tpu.vector_store %arg8[%c0_132, %c0_133, %c0_134, %c0_135], %88 {strides = array<i32>} : memref<1x10x10x64xf32, #tpu.memory_space<vmem>>, vector<1x10x10x64xf32>,
      %c0_136 = arith.constant 0 : index
      %c0_137 = arith.constant 0 : index
      %c0_138 = arith.constant 0 : index
      %c0_139 = arith.constant 0 : index
      %90 = vector.load %arg2[%c0_136, %c0_137, %c0_138, %c0_139] : memref<1x8x8x64xf32, #tpu.memory_space<vmem>>, vector<1x8x8x64xf32>
      %c0_140 = arith.constant 0 : index
      %c1_141 = arith.constant 1 : index
      %c1_142 = arith.constant 1 : index
      %c0_143 = arith.constant 0 : index
      %91 = vector.load %arg8[%c0_140, %c1_141, %c1_142, %c0_143] : memref<1x10x10x64xf32, #tpu.memory_space<vmem>>, vector<1x8x8x64xf32>
      tpu.vector_store %arg8[%c0_140, %c1_141, %c1_142, %c0_143], %90 {strides = array<i32>} : memref<1x10x10x64xf32, #tpu.memory_space<vmem>>, vector<1x8x8x64xf32>,
    } else {
    }
    %c0 = arith.constant 0 : index
    %c0_1 = arith.constant 0 : index
    %c0_2 = arith.constant 0 : index
    %c0_3 = arith.constant 0 : index
    %3 = vector.load %arg8[%c0, %c0_1, %c0_2, %c0_3] : memref<1x10x10x64xf32, #tpu.memory_space<vmem>>, vector<1x8x8x64xf32>
    %4 = vector.shape_cast %3 : vector<1x8x8x64xf32> to vector<64x64xf32>
    %c0_4 = arith.constant 0 : index
    %c0_5 = arith.constant 0 : index
    %5 = vector.load %arg9[%c0_4, %c0_5] : memref<64x576xf32, #tpu.memory_space<vmem>>, vector<64x64xf32>
    tpu.vector_store %arg9[%c0_4, %c0_5], %4 {strides = array<i32>} : memref<64x576xf32, #tpu.memory_space<vmem>>, vector<64x64xf32>,
    %c0_6 = arith.constant 0 : index
    %c0_7 = arith.constant 0 : index
    %c1 = arith.constant 1 : index
    %c0_8 = arith.constant 0 : index
    %6 = vector.load %arg8[%c0_6, %c0_7, %c1, %c0_8] : memref<1x10x10x64xf32, #tpu.memory_space<vmem>>, vector<1x8x8x64xf32>
    %7 = vector.shape_cast %6 : vector<1x8x8x64xf32> to vector<64x64xf32>
    %c0_9 = arith.constant 0 : index
    %c64 = arith.constant 64 : index
    %8 = vector.load %arg9[%c0_9, %c64] : memref<64x576xf32, #tpu.memory_space<vmem>>, vector<64x64xf32>
    tpu.vector_store %arg9[%c0_9, %c64], %7 {strides = array<i32>} : memref<64x576xf32, #tpu.memory_space<vmem>>, vector<64x64xf32>,
    %c0_10 = arith.constant 0 : index
    %c0_11 = arith.constant 0 : index
    %c2 = arith.constant 2 : index
    %c0_12 = arith.constant 0 : index
    %9 = vector.load %arg8[%c0_10, %c0_11, %c2, %c0_12] : memref<1x10x10x64xf32, #tpu.memory_space<vmem>>, vector<1x8x8x64xf32>
    %10 = vector.shape_cast %9 : vector<1x8x8x64xf32> to vector<64x64xf32>
    %c0_13 = arith.constant 0 : index
    %c128 = arith.constant 128 : index
    %11 = vector.load %arg9[%c0_13, %c128] : memref<64x576xf32, #tpu.memory_space<vmem>>, vector<64x64xf32>
    tpu.vector_store %arg9[%c0_13, %c128], %10 {strides = array<i32>} : memref<64x576xf32, #tpu.memory_space<vmem>>, vector<64x64xf32>,
    %c0_14 = arith.constant 0 : index
    %c1_15 = arith.constant 1 : index
    %c0_16 = arith.constant 0 : index
    %c0_17 = arith.constant 0 : index
    %12 = vector.load %arg8[%c0_14, %c1_15, %c0_16, %c0_17] : memref<1x10x10x64xf32, #tpu.memory_space<vmem>>, vector<1x8x8x64xf32>
    %13 = vector.shape_cast %12 : vector<1x8x8x64xf32> to vector<64x64xf32>
    %c0_18 = arith.constant 0 : index
    %c192 = arith.constant 192 : index
    %14 = vector.load %arg9[%c0_18, %c192] : memref<64x576xf32, #tpu.memory_space<vmem>>, vector<64x64xf32>
    tpu.vector_store %arg9[%c0_18, %c192], %13 {strides = array<i32>} : memref<64x576xf32, #tpu.memory_space<vmem>>, vector<64x64xf32>,
    %c0_19 = arith.constant 0 : index
    %c1_20 = arith.constant 1 : index
    %c1_21 = arith.constant 1 : index
    %c0_22 = arith.constant 0 : index
    %15 = vector.load %arg8[%c0_19, %c1_20, %c1_21, %c0_22] : memref<1x10x10x64xf32, #tpu.memory_space<vmem>>, vector<1x8x8x64xf32>
    %16 = vector.shape_cast %15 : vector<1x8x8x64xf32> to vector<64x64xf32>
    %c0_23 = arith.constant 0 : index
    %c256 = arith.constant 256 : index
    %17 = vector.load %arg9[%c0_23, %c256] : memref<64x576xf32, #tpu.memory_space<vmem>>, vector<64x64xf32>
    tpu.vector_store %arg9[%c0_23, %c256], %16 {strides = array<i32>} : memref<64x576xf32, #tpu.memory_space<vmem>>, vector<64x64xf32>,
    %c0_24 = arith.constant 0 : index
    %c1_25 = arith.constant 1 : index
    %c2_26 = arith.constant 2 : index
    %c0_27 = arith.constant 0 : index
    %18 = vector.load %arg8[%c0_24, %c1_25, %c2_26, %c0_27] : memref<1x10x10x64xf32, #tpu.memory_space<vmem>>, vector<1x8x8x64xf32>
    %19 = vector.shape_cast %18 : vector<1x8x8x64xf32> to vector<64x64xf32>
    %c0_28 = arith.constant 0 : index
    %c320 = arith.constant 320 : index
    %20 = vector.load %arg9[%c0_28, %c320] : memref<64x576xf32, #tpu.memory_space<vmem>>, vector<64x64xf32>
    tpu.vector_store %arg9[%c0_28, %c320], %19 {strides = array<i32>} : memref<64x576xf32, #tpu.memory_space<vmem>>, vector<64x64xf32>,
    %c0_29 = arith.constant 0 : index
    %c2_30 = arith.constant 2 : index
    %c0_31 = arith.constant 0 : index
    %c0_32 = arith.constant 0 : index
    %21 = vector.load %arg8[%c0_29, %c2_30, %c0_31, %c0_32] : memref<1x10x10x64xf32, #tpu.memory_space<vmem>>, vector<1x8x8x64xf32>
    %22 = vector.shape_cast %21 : vector<1x8x8x64xf32> to vector<64x64xf32>
    %c0_33 = arith.constant 0 : index
    %c384 = arith.constant 384 : index
    %23 = vector.load %arg9[%c0_33, %c384] : memref<64x576xf32, #tpu.memory_space<vmem>>, vector<64x64xf32>
    tpu.vector_store %arg9[%c0_33, %c384], %22 {strides = array<i32>} : memref<64x576xf32, #tpu.memory_space<vmem>>, vector<64x64xf32>,
    %c0_34 = arith.constant 0 : index
    %c2_35 = arith.constant 2 : index
    %c1_36 = arith.constant 1 : index
    %c0_37 = arith.constant 0 : index
    %24 = vector.load %arg8[%c0_34, %c2_35, %c1_36, %c0_37] : memref<1x10x10x64xf32, #tpu.memory_space<vmem>>, vector<1x8x8x64xf32>
    %25 = vector.shape_cast %24 : vector<1x8x8x64xf32> to vector<64x64xf32>
    %c0_38 = arith.constant 0 : index
    %c448 = arith.constant 448 : index
    %26 = vector.load %arg9[%c0_38, %c448] : memref<64x576xf32, #tpu.memory_space<vmem>>, vector<64x64xf32>
    tpu.vector_store %arg9[%c0_38, %c448], %25 {strides = array<i32>} : memref<64x576xf32, #tpu.memory_space<vmem>>, vector<64x64xf32>,
    %c0_39 = arith.constant 0 : index
    %c2_40 = arith.constant 2 : index
    %c2_41 = arith.constant 2 : index
    %c0_42 = arith.constant 0 : index
    %27 = vector.load %arg8[%c0_39, %c2_40, %c2_41, %c0_42] : memref<1x10x10x64xf32, #tpu.memory_space<vmem>>, vector<1x8x8x64xf32>
    %28 = vector.shape_cast %27 : vector<1x8x8x64xf32> to vector<64x64xf32>
    %c0_43 = arith.constant 0 : index
    %c512 = arith.constant 512 : index
    %29 = vector.load %arg9[%c0_43, %c512] : memref<64x576xf32, #tpu.memory_space<vmem>>, vector<64x64xf32>
    tpu.vector_store %arg9[%c0_43, %c512], %28 {strides = array<i32>} : memref<64x576xf32, #tpu.memory_space<vmem>>, vector<64x64xf32>,
    %c0_44 = arith.constant 0 : index
    %c0_45 = arith.constant 0 : index
    %30 = vector.load %arg9[%c0_44, %c0_45] : memref<64x576xf32, #tpu.memory_space<vmem>>, vector<64x576xf32>
    %c0_46 = arith.constant 0 : index
    %c0_47 = arith.constant 0 : index
    %c0_48 = arith.constant 0 : index
    %31 = vector.load %arg3[%c0_46, %c0_47, %c0_48] : memref<1x576x64xf32, #tpu.memory_space<vmem>>, vector<1x576x64xf32>
    %32 = vector.shape_cast %31 : vector<1x576x64xf32> to vector<576x64xf32>
    %cst = arith.constant dense<0.000000e+00> : vector<64x64xf32>
    %33 = tpu.matmul %30, %32, %cst {dimension_numbers = #tpu.dot_dimension_numbers<[1], [0], [0], [1], [0, 0, 1, 1], [], []>} : vector<64x576xf32>, vector<576x64xf32>, vector<64x64xf32> -> vector<64x64xf32>
    %c0_49 = arith.constant 0 : index
    %c0_50 = arith.constant 0 : index
    %c0_51 = arith.constant 0 : index
    %34 = vector.load %arg4[%c0_49, %c0_50, %c0_51] : memref<1x1x64xf32, #tpu.memory_space<vmem>>, vector<1x1x64xf32>
    %35 = vector.shape_cast %34 : vector<1x1x64xf32> to vector<1x64xf32>
    %36 = vector.broadcast %35 : vector<1x64xf32> to vector<64x64xf32>
    %37 = arith.addf %33, %36 : vector<64x64xf32>
    %cst_52 = arith.constant 0.000000e+00 : f32
    %38 = vector.broadcast %cst_52 : f32 to vector<64x64xf32>
    %39 = arith.maximumf %37, %38 : vector<64x64xf32>
    %40 = vector.shape_cast %39 : vector<64x64xf32> to vector<1x8x8x64xf32>
    %c0_53 = arith.constant 0 : index
    %c1_54 = arith.constant 1 : index
    %c1_55 = arith.constant 1 : index
    %c0_56 = arith.constant 0 : index
    %41 = vector.load %arg8[%c0_53, %c1_54, %c1_55, %c0_56] : memref<1x10x10x64xf32, #tpu.memory_space<vmem>>, vector<1x8x8x64xf32>
    tpu.vector_store %arg8[%c0_53, %c1_54, %c1_55, %c0_56], %40 {strides = array<i32>} : memref<1x10x10x64xf32, #tpu.memory_space<vmem>>, vector<1x8x8x64xf32>,
    %c0_57 = arith.constant 0 : index
    %c0_58 = arith.constant 0 : index
    %c0_59 = arith.constant 0 : index
    %c0_60 = arith.constant 0 : index
    %42 = vector.load %arg8[%c0_57, %c0_58, %c0_59, %c0_60] : memref<1x10x10x64xf32, #tpu.memory_space<vmem>>, vector<1x8x8x64xf32>
    %43 = vector.shape_cast %42 : vector<1x8x8x64xf32> to vector<64x64xf32>
    %c0_61 = arith.constant 0 : index
    %c0_62 = arith.constant 0 : index
    %44 = vector.load %arg9[%c0_61, %c0_62] : memref<64x576xf32, #tpu.memory_space<vmem>>, vector<64x64xf32>
    tpu.vector_store %arg9[%c0_61, %c0_62], %43 {strides = array<i32>} : memref<64x576xf32, #tpu.memory_space<vmem>>, vector<64x64xf32>,
    %c0_63 = arith.constant 0 : index
    %c0_64 = arith.constant 0 : index
    %c1_65 = arith.constant 1 : index
    %c0_66 = arith.constant 0 : index
    %45 = vector.load %arg8[%c0_63, %c0_64, %c1_65, %c0_66] : memref<1x10x10x64xf32, #tpu.memory_space<vmem>>, vector<1x8x8x64xf32>
    %46 = vector.shape_cast %45 : vector<1x8x8x64xf32> to vector<64x64xf32>
    %c0_67 = arith.constant 0 : index
    %c64_68 = arith.constant 64 : index
    %47 = vector.load %arg9[%c0_67, %c64_68] : memref<64x576xf32, #tpu.memory_space<vmem>>, vector<64x64xf32>
    tpu.vector_store %arg9[%c0_67, %c64_68], %46 {strides = array<i32>} : memref<64x576xf32, #tpu.memory_space<vmem>>, vector<64x64xf32>,
    %c0_69 = arith.constant 0 : index
    %c0_70 = arith.constant 0 : index
    %c2_71 = arith.constant 2 : index
    %c0_72 = arith.constant 0 : index
    %48 = vector.load %arg8[%c0_69, %c0_70, %c2_71, %c0_72] : memref<1x10x10x64xf32, #tpu.memory_space<vmem>>, vector<1x8x8x64xf32>
    %49 = vector.shape_cast %48 : vector<1x8x8x64xf32> to vector<64x64xf32>
    %c0_73 = arith.constant 0 : index
    %c128_74 = arith.constant 128 : index
    %50 = vector.load %arg9[%c0_73, %c128_74] : memref<64x576xf32, #tpu.memory_space<vmem>>, vector<64x64xf32>
    tpu.vector_store %arg9[%c0_73, %c128_74], %49 {strides = array<i32>} : memref<64x576xf32, #tpu.memory_space<vmem>>, vector<64x64xf32>,
    %c0_75 = arith.constant 0 : index
    %c1_76 = arith.constant 1 : index
    %c0_77 = arith.constant 0 : index
    %c0_78 = arith.constant 0 : index
    %51 = vector.load %arg8[%c0_75, %c1_76, %c0_77, %c0_78] : memref<1x10x10x64xf32, #tpu.memory_space<vmem>>, vector<1x8x8x64xf32>
    %52 = vector.shape_cast %51 : vector<1x8x8x64xf32> to vector<64x64xf32>
    %c0_79 = arith.constant 0 : index
    %c192_80 = arith.constant 192 : index
    %53 = vector.load %arg9[%c0_79, %c192_80] : memref<64x576xf32, #tpu.memory_space<vmem>>, vector<64x64xf32>
    tpu.vector_store %arg9[%c0_79, %c192_80], %52 {strides = array<i32>} : memref<64x576xf32, #tpu.memory_space<vmem>>, vector<64x64xf32>,
    %c0_81 = arith.constant 0 : index
    %c1_82 = arith.constant 1 : index
    %c1_83 = arith.constant 1 : index
    %c0_84 = arith.constant 0 : index
    %54 = vector.load %arg8[%c0_81, %c1_82, %c1_83, %c0_84] : memref<1x10x10x64xf32, #tpu.memory_space<vmem>>, vector<1x8x8x64xf32>
    %55 = vector.shape_cast %54 : vector<1x8x8x64xf32> to vector<64x64xf32>
    %c0_85 = arith.constant 0 : index
    %c256_86 = arith.constant 256 : index
    %56 = vector.load %arg9[%c0_85, %c256_86] : memref<64x576xf32, #tpu.memory_space<vmem>>, vector<64x64xf32>
    tpu.vector_store %arg9[%c0_85, %c256_86], %55 {strides = array<i32>} : memref<64x576xf32, #tpu.memory_space<vmem>>, vector<64x64xf32>,
    %c0_87 = arith.constant 0 : index
    %c1_88 = arith.constant 1 : index
    %c2_89 = arith.constant 2 : index
    %c0_90 = arith.constant 0 : index
    %57 = vector.load %arg8[%c0_87, %c1_88, %c2_89, %c0_90] : memref<1x10x10x64xf32, #tpu.memory_space<vmem>>, vector<1x8x8x64xf32>
    %58 = vector.shape_cast %57 : vector<1x8x8x64xf32> to vector<64x64xf32>
    %c0_91 = arith.constant 0 : index
    %c320_92 = arith.constant 320 : index
    %59 = vector.load %arg9[%c0_91, %c320_92] : memref<64x576xf32, #tpu.memory_space<vmem>>, vector<64x64xf32>
    tpu.vector_store %arg9[%c0_91, %c320_92], %58 {strides = array<i32>} : memref<64x576xf32, #tpu.memory_space<vmem>>, vector<64x64xf32>,
    %c0_93 = arith.constant 0 : index
    %c2_94 = arith.constant 2 : index
    %c0_95 = arith.constant 0 : index
    %c0_96 = arith.constant 0 : index
    %60 = vector.load %arg8[%c0_93, %c2_94, %c0_95, %c0_96] : memref<1x10x10x64xf32, #tpu.memory_space<vmem>>, vector<1x8x8x64xf32>
    %61 = vector.shape_cast %60 : vector<1x8x8x64xf32> to vector<64x64xf32>
    %c0_97 = arith.constant 0 : index
    %c384_98 = arith.constant 384 : index
    %62 = vector.load %arg9[%c0_97, %c384_98] : memref<64x576xf32, #tpu.memory_space<vmem>>, vector<64x64xf32>
    tpu.vector_store %arg9[%c0_97, %c384_98], %61 {strides = array<i32>} : memref<64x576xf32, #tpu.memory_space<vmem>>, vector<64x64xf32>,
    %c0_99 = arith.constant 0 : index
    %c2_100 = arith.constant 2 : index
    %c1_101 = arith.constant 1 : index
    %c0_102 = arith.constant 0 : index
    %63 = vector.load %arg8[%c0_99, %c2_100, %c1_101, %c0_102] : memref<1x10x10x64xf32, #tpu.memory_space<vmem>>, vector<1x8x8x64xf32>
    %64 = vector.shape_cast %63 : vector<1x8x8x64xf32> to vector<64x64xf32>
    %c0_103 = arith.constant 0 : index
    %c448_104 = arith.constant 448 : index
    %65 = vector.load %arg9[%c0_103, %c448_104] : memref<64x576xf32, #tpu.memory_space<vmem>>, vector<64x64xf32>
    tpu.vector_store %arg9[%c0_103, %c448_104], %64 {strides = array<i32>} : memref<64x576xf32, #tpu.memory_space<vmem>>, vector<64x64xf32>,
    %c0_105 = arith.constant 0 : index
    %c2_106 = arith.constant 2 : index
    %c2_107 = arith.constant 2 : index
    %c0_108 = arith.constant 0 : index
    %66 = vector.load %arg8[%c0_105, %c2_106, %c2_107, %c0_108] : memref<1x10x10x64xf32, #tpu.memory_space<vmem>>, vector<1x8x8x64xf32>
    %67 = vector.shape_cast %66 : vector<1x8x8x64xf32> to vector<64x64xf32>
    %c0_109 = arith.constant 0 : index
    %c512_110 = arith.constant 512 : index
    %68 = vector.load %arg9[%c0_109, %c512_110] : memref<64x576xf32, #tpu.memory_space<vmem>>, vector<64x64xf32>
    tpu.vector_store %arg9[%c0_109, %c512_110], %67 {strides = array<i32>} : memref<64x576xf32, #tpu.memory_space<vmem>>, vector<64x64xf32>,
    %c0_111 = arith.constant 0 : index
    %c0_112 = arith.constant 0 : index
    %69 = vector.load %arg9[%c0_111, %c0_112] : memref<64x576xf32, #tpu.memory_space<vmem>>, vector<64x576xf32>
    %c0_113 = arith.constant 0 : index
    %c0_114 = arith.constant 0 : index
    %c0_115 = arith.constant 0 : index
    %70 = vector.load %arg5[%c0_113, %c0_114, %c0_115] : memref<1x576x64xf32, #tpu.memory_space<vmem>>, vector<1x576x64xf32>
    %71 = vector.shape_cast %70 : vector<1x576x64xf32> to vector<576x64xf32>
    %cst_116 = arith.constant dense<0.000000e+00> : vector<64x64xf32>
    %72 = tpu.matmul %69, %71, %cst_116 {dimension_numbers = #tpu.dot_dimension_numbers<[1], [0], [0], [1], [0, 0, 1, 1], [], []>} : vector<64x576xf32>, vector<576x64xf32>, vector<64x64xf32> -> vector<64x64xf32>
    %c0_117 = arith.constant 0 : index
    %c0_118 = arith.constant 0 : index
    %c0_119 = arith.constant 0 : index
    %73 = vector.load %arg6[%c0_117, %c0_118, %c0_119] : memref<1x1x64xf32, #tpu.memory_space<vmem>>, vector<1x1x64xf32>
    %74 = vector.shape_cast %73 : vector<1x1x64xf32> to vector<1x64xf32>
    %75 = vector.broadcast %74 : vector<1x64xf32> to vector<64x64xf32>
    %76 = arith.addf %72, %75 : vector<64x64xf32>
    %cst_120 = arith.constant 0.000000e+00 : f32
    %77 = vector.broadcast %cst_120 : f32 to vector<64x64xf32>
    %78 = arith.maximumf %76, %77 : vector<64x64xf32>
    %79 = vector.shape_cast %78 : vector<64x64xf32> to vector<1x8x8x64xf32>
    %c0_121 = arith.constant 0 : index
    %c0_122 = arith.constant 0 : index
    %c0_123 = arith.constant 0 : index
    %c0_124 = arith.constant 0 : index
    %80 = vector.load %arg2[%c0_121, %c0_122, %c0_123, %c0_124] : memref<1x8x8x64xf32, #tpu.memory_space<vmem>>, vector<1x8x8x64xf32>
    %81 = arith.addf %79, %80 : vector<1x8x8x64xf32>
    %cst_125 = arith.constant 0.000000e+00 : f32
    %82 = vector.broadcast %cst_125 : f32 to vector<1x8x8x64xf32>
    %83 = arith.maximumf %81, %82 : vector<1x8x8x64xf32>
    %c0_126 = arith.constant 0 : index
    %c1_127 = arith.constant 1 : index
    %c1_128 = arith.constant 1 : index
    %c0_129 = arith.constant 0 : index
    %84 = vector.load %arg8[%c0_126, %c1_127, %c1_128, %c0_129] : memref<1x10x10x64xf32, #tpu.memory_space<vmem>>, vector<1x8x8x64xf32>
    tpu.vector_store %arg8[%c0_126, %c1_127, %c1_128, %c0_129], %83 {strides = array<i32>} : memref<1x10x10x64xf32, #tpu.memory_space<vmem>>, vector<1x8x8x64xf32>,
    %c8_i32 = arith.constant 8 : i32
    %85 = arith.cmpi eq, %arg1, %c8_i32 : i32
    %86 = arith.extui %85 : i1 to i32
    %c0_i32_130 = arith.constant 0 : i32
    %87 = arith.cmpi ne, %86, %c0_i32_130 : i32
    scf.if %87 {
      %c0_131 = arith.constant 0 : index
      %c0_132 = arith.constant 0 : index
      %c0_133 = arith.constant 0 : index
      %c0_134 = arith.constant 0 : index
      %88 = vector.load %arg7[%c0_131, %c0_132, %c0_133, %c0_134] : memref<1x8x8x64xf32, #tpu.memory_space<vmem>>, vector<1x8x8x64xf32>
      tpu.vector_store %arg7[%c0_131, %c0_132, %c0_133, %c0_134], %83 {strides = array<i32>} : memref<1x8x8x64xf32, #tpu.memory_space<vmem>>, vector<1x8x8x64xf32>,
    } else {
    }
    return
  }
  func.func @transform_0(%arg0: i32, %arg1: i32) -> (i32, i32, i32, i32) {
    %c0_i32 = arith.constant 0 : i32
    %c0_i32_0 = arith.constant 0 : i32
    %c0_i32_1 = arith.constant 0 : i32
    %c0_i32_2 = arith.constant 0 : i32
    return %arg0, %c0_i32, %c0_i32_0, %c0_i32_1 : i32, i32, i32, i32
  }
  func.func @transform_1(%arg0: i32, %arg1: i32) -> (i32, i32, i32) {
    %c0_i32 = arith.constant 0 : i32
    %c0_i32_0 = arith.constant 0 : i32
    %c0_i32_1 = arith.constant 0 : i32
    return %arg1, %c0_i32, %c0_i32_0 : i32, i32, i32
  }
  func.func @transform_2(%arg0: i32, %arg1: i32) -> (i32, i32, i32) {
    %c0_i32 = arith.constant 0 : i32
    %c0_i32_0 = arith.constant 0 : i32
    %c0_i32_1 = arith.constant 0 : i32
    return %arg1, %c0_i32, %c0_i32_0 : i32, i32, i32
  }
  func.func @transform_3(%arg0: i32, %arg1: i32) -> (i32, i32, i32) {
    %c0_i32 = arith.constant 0 : i32
    %c0_i32_0 = arith.constant 0 : i32
    %c0_i32_1 = arith.constant 0 : i32
    return %arg1, %c0_i32, %c0_i32_0 : i32, i32, i32
  }
  func.func @transform_4(%arg0: i32, %arg1: i32) -> (i32, i32, i32) {
    %c0_i32 = arith.constant 0 : i32
    %c0_i32_0 = arith.constant 0 : i32
    %c0_i32_1 = arith.constant 0 : i32
    return %arg1, %c0_i32, %c0_i32_0 : i32, i32, i32
  }
  func.func @transform_5(%arg0: i32, %arg1: i32) -> (i32, i32, i32, i32) {
    %c0_i32 = arith.constant 0 : i32
    %c0_i32_0 = arith.constant 0 : i32
    %c0_i32_1 = arith.constant 0 : i32
    %c0_i32_2 = arith.constant 0 : i32
    return %arg0, %c0_i32, %c0_i32_0, %c0_i32_1 : i32, i32, i32, i32
  }
}

</mosaic_0001>

<llo_original>
// kernel: residual_block_forward.1
$region0: #{residual_block_forward.1}
  #allocation0 [shape = 'u32[]', space=smem, size = 0x4, offset = 0x4, fixed_abs, tag = 'smem constant byte address 0x4 - core index']
  #allocation1 [shape = 'u32[144,128]{1,0:T(1,128)}', space=vmem, size = 0x12000, scoped, tag = 'internal scratch']
  #allocation2 [shape = 'f32[1,10,10,64]{3,2,1,0:T(8,128)}', space=vmem, size = 0x14000, scoped, tag = 'scratch operand']
  #allocation3 [shape = 'f32[64,576]{1,0:T(8,128)}', space=vmem, size = 0x28000, scoped, tag = 'scratch operand']
  %s0 = inlined_call_operand.vmem [shape: f32[2,8,8,64], index: 0, kind: input, shape index: {}]
  %s1 = inlined_call_operand.vmem [shape: f32[9,576,64], index: 1, kind: input, shape index: {}]
  %s2 = inlined_call_operand.vmem [shape: f32[9,1,64], index: 2, kind: input, shape index: {}]
  %s3 = inlined_call_operand.vmem [shape: f32[9,576,64], index: 3, kind: input, shape index: {}]
  %s4 = inlined_call_operand.vmem [shape: f32[9,1,64], index: 4, kind: input, shape index: {}]
  %s5 = inlined_call_operand.hbm [shape: f32[2,8,8,64], index: 5, kind: output, shape index: {}]
  %s6 = sld [smem:[#allocation0]]
  $region61: #{residual_block_forward.1} parent=0
    _
  %s8 = ssub.s32 1, %s6
  %s9 = scalar_select 0, %s8, %s6
  $region1: #{residual_block_forward.1} parent=0
    #allocation4 [shape = 'u8[65536]{0}', space=vmem, size = 0x10000, scoped, tag = 'output window, operand 0']
    #allocation5 [shape = 's32[2]{0}', space=sflag, size = 0x8, scoped, tag = 'scoped memory for residual_block_forward.1']
    %10 = vsyncpa [#allocation5], 0
    %s11 = scalar_lea.sflag [#allocation5], 1
    %12 = vsyncpa %s11, 0
    loop: start=0, step=1, limit=20
    $region2: #{residual_block_forward.1} parent=1 // loop_pre_header
      _
    $region3: #{residual_block_forward.1} parent=1 // loop_header
      %s14 = sphi 0, %s18
      %p15 = scmp.ge.s32.totalorder %s14, 20
      %s21 = sphi 0, %s33
      %s22 = sphi 0, %s29
      %s23 = sphi 0, %s21
      %s24 = sphi 0, %s22
      %s25 = sphi 0, %s23
      %s26 = sphi 0, %s24
      %s36 = sphi 0, %s38
      %s39 = sphi 0, %s36
      %s40 = sphi 0, %s39
      %s56 = sphi 0, %s40
      %s62 = sphi 0, %s64
      %s65 = sphi 0, %s62
      %s66 = sphi 0, %s65
      %s82 = sphi 0, %s66
      %s88 = sphi 0, %s90
      %s91 = sphi 0, %s88
      %s92 = sphi 0, %s91
      %s108 = sphi 0, %s92
      %s114 = sphi 0, %s116
      %s117 = sphi 0, %s114
      %s118 = sphi 0, %s117
      %s134 = sphi 0, %s118
      %s140 = sphi 0, %s142
      %s143 = sphi 0, %s140
      %s144 = sphi 0, %s143
      %s160 = sphi 0, %s144
      %s166 = sphi 0, %s168
      %s169 = sphi 0, %s166
      %s170 = sphi 0, %s169
      %s186 = sphi 0, %s170
    $region4: #{residual_block_forward.1} parent=1 // loop_header_branch
      %17 = sbr.rel (%p15) target = $region8
    $region5: #{residual_block_forward.1} parent=1 // loop_body
      %s19 = ssub.s32 %s14, 1
      %s20 = ssub.s32 %s14, 2
      %s27 = sadd.s32 1, %s22
      %p28 = scmp.ge.s32.totalorder %s27, 9
      %s29 = scalar_select %p28, 0, %s27
      %s30 = sadd.s32 1, %s21
      %s31 = scalar_select %p28, %s30, %s21
      %p32 = scmp.ge.s32.totalorder %s31, 2
      %s33 = scalar_select %p32, 0, %s31
      %s34 = ssub.s32 %s21, %s33
      %p35 = scmp.eq.s32.totalorder %s34, 0
      %s37 = sadd.s32 %s36, 1
      %s38 = scalar_select %p35, %s36, %s37
      %p41 = pneg %p35
      %p42 = scmp.eq.s32.totalorder %s14, 17
      %p43 = por %p41, %p42
      %p44 = scmp.ne.s32.totalorder %s36, %s39
      %p45 = scmp.eq.s32.totalorder %s14, 0
      %p46 = por %p44, %p45
      %p47 = scmp.ne.s32.totalorder %s36, %s39
      %p48 = scmp.eq.s32.totalorder %s19, 17
      %p49 = por %p47, %p48
      %p50 = scmp.ne.s32.totalorder %s39, %s40
      %p51 = scmp.eq.s32.totalorder %s19, 0
      %p52 = por %p50, %p51
      %p53 = scmp.ne.s32.totalorder %s39, %s40
      %p54 = scmp.eq.s32.totalorder %s20, 17
      %p55 = por %p53, %p54
      %p57 = scmp.ne.s32.totalorder %s40, %s56
      %p58 = scmp.eq.s32.totalorder %s20, 0
      %p59 = por %p57, %p58
      %s60 = ssub.s32 %s22, %s29
      %p61 = scmp.eq.s32.totalorder %s60, 0
      %s63 = sadd.s32 %s62, 1
      %s64 = scalar_select %p61, %s62, %s63
      %p67 = pneg %p61
      %p68 = scmp.eq.s32.totalorder %s14, 17
      %p69 = por %p67, %p68
      %p70 = scmp.ne.s32.totalorder %s62, %s65
      %p71 = scmp.eq.s32.totalorder %s14, 0
      %p72 = por %p70, %p71
      %p73 = scmp.ne.s32.totalorder %s62, %s65
      %p74 = scmp.eq.s32.totalorder %s19, 17
      %p75 = por %p73, %p74
      %p76 = scmp.ne.s32.totalorder %s65, %s66
      %p77 = scmp.eq.s32.totalorder %s19, 0
      %p78 = por %p76, %p77
      %p79 = scmp.ne.s32.totalorder %s65, %s66
      %p80 = scmp.eq.s32.totalorder %s20, 17
      %p81 = por %p79, %p80
      %p83 = scmp.ne.s32.totalorder %s66, %s82
      %p84 = scmp.eq.s32.totalorder %s20, 0
      %p85 = por %p83, %p84
      %s86 = ssub.s32 %s22, %s29
      %p87 = scmp.eq.s32.totalorder %s86, 0
      %s89 = sadd.s32 %s88, 1
      %s90 = scalar_select %p87, %s88, %s89
      %p93 = pneg %p87
      %p94 = scmp.eq.s32.totalorder %s14, 17
      %p95 = por %p93, %p94
      %p96 = scmp.ne.s32.totalorder %s88, %s91
      %p97 = scmp.eq.s32.totalorder %s14, 0
      %p98 = por %p96, %p97
      %p99 = scmp.ne.s32.totalorder %s88, %s91
      %p100 = scmp.eq.s32.totalorder %s19, 17
      %p101 = por %p99, %p100
      %p102 = scmp.ne.s32.totalorder %s91, %s92
      %p103 = scmp.eq.s32.totalorder %s19, 0
      %p104 = por %p102, %p103
      %p105 = scmp.ne.s32.totalorder %s91, %s92
      %p106 = scmp.eq.s32.totalorder %s20, 17
      %p107 = por %p105, %p106
      %p109 = scmp.ne.s32.totalorder %s92, %s108
      %p110 = scmp.eq.s32.totalorder %s20, 0
      %p111 = por %p109, %p110
      %s112 = ssub.s32 %s22, %s29
      %p113 = scmp.eq.s32.totalorder %s112, 0
      %s115 = sadd.s32 %s114, 1
      %s116 = scalar_select %p113, %s114, %s115
      %p119 = pneg %p113
      %p120 = scmp.eq.s32.totalorder %s14, 17
      %p121 = por %p119, %p120
      %p122 = scmp.ne.s32.totalorder %s114, %s117
      %p123 = scmp.eq.s32.totalorder %s14, 0
      %p124 = por %p122, %p123
      %p125 = scmp.ne.s32.totalorder %s114, %s117
      %p126 = scmp.eq.s32.totalorder %s19, 17
      %p127 = por %p125, %p126
      %p128 = scmp.ne.s32.totalorder %s117, %s118
      %p129 = scmp.eq.s32.totalorder %s19, 0
      %p130 = por %p128, %p129
      %p131 = scmp.ne.s32.totalorder %s117, %s118
      %p132 = scmp.eq.s32.totalorder %s20, 17
      %p133 = por %p131, %p132
      %p135 = scmp.ne.s32.totalorder %s118, %s134
      %p136 = scmp.eq.s32.totalorder %s20, 0
      %p137 = por %p135, %p136
      %s138 = ssub.s32 %s22, %s29
      %p139 = scmp.eq.s32.totalorder %s138, 0
      %s141 = sadd.s32 %s140, 1
      %s142 = scalar_select %p139, %s140, %s141
      %p145 = pneg %p139
      %p146 = scmp.eq.s32.totalorder %s14, 17
      %p147 = por %p145, %p146
      %p148 = scmp.ne.s32.totalorder %s140, %s143
      %p149 = scmp.eq.s32.totalorder %s14, 0
      %p150 = por %p148, %p149
      %p151 = scmp.ne.s32.totalorder %s140, %s143
      %p152 = scmp.eq.s32.totalorder %s19, 17
      %p153 = por %p151, %p152
      %p154 = scmp.ne.s32.totalorder %s143, %s144
      %p155 = scmp.eq.s32.totalorder %s19, 0
      %p156 = por %p154, %p155
      %p157 = scmp.ne.s32.totalorder %s143, %s144
      %p158 = scmp.eq.s32.totalorder %s20, 17
      %p159 = por %p157, %p158
      %p161 = scmp.ne.s32.totalorder %s144, %s160
      %p162 = scmp.eq.s32.totalorder %s20, 0
      %p163 = por %p161, %p162
      %s164 = ssub.s32 %s21, %s33
      %p165 = scmp.eq.s32.totalorder %s164, 0
      %s167 = sadd.s32 %s166, 1
      %s168 = scalar_select %p165, %s166, %s167
      %p171 = pneg %p165
      %p172 = scmp.eq.s32.totalorder %s14, 17
      %p173 = por %p171, %p172
      %p174 = scmp.ne.s32.totalorder %s166, %s169
      %p175 = scmp.eq.s32.totalorder %s14, 0
      %p176 = por %p174, %p175
      %p177 = scmp.ne.s32.totalorder %s166, %s169
      %p178 = scmp.eq.s32.totalorder %s19, 17
      %p179 = por %p177, %p178
      %p180 = scmp.ne.s32.totalorder %s169, %s170
      %p181 = scmp.eq.s32.totalorder %s19, 0
      %p182 = por %p180, %p181
      %p183 = scmp.ne.s32.totalorder %s169, %s170
      %p184 = scmp.eq.s32.totalorder %s20, 17
      %p185 = por %p183, %p184
      %p187 = scmp.ne.s32.totalorder %s170, %s186
      %p188 = scmp.eq.s32.totalorder %s20, 0
      %p189 = por %p187, %p188
      %p190 = scmp.le.s32.totalorder 1, %s14
      %p191 = scmp.lt.s32.totalorder %s14, 19
      %p192 = pnand %p190, %p191
      %p193 = pneg %p192
      // Predicated region
      $region9: #{residual_block_forward.1} parent=5 // pred_check
        _
      $region10: #{residual_block_forward.1} parent=5 // pred_check_branch
        %195 = sbr.rel (%p192) target = $region12
      $region11: #{residual_block_forward.1} parent=5 // pred_region
        %s196 = ssub.s32 %s14, 1
      $region12: #{residual_block_forward.1} parent=5 // pred_fallthru
        _
      %p197 = scmp.lt.s32.totalorder %s14, 18
      // Predicated region
      $region13: #{residual_block_forward.1} parent=5 // pred_check
        %p198 = pneg %p197
      $region14: #{residual_block_forward.1} parent=5 // pred_check_branch
        %200 = sbr.rel (%p198) target = $region16
      $region15: #{residual_block_forward.1} parent=5 // pred_region
        // Predicated region
        $region17: #{residual_block_forward.1} parent=15 // pred_check
          %p201 = pneg %p46
        $region18: #{residual_block_forward.1} parent=15 // pred_check_branch
          %203 = sbr.rel (%p201) target = $region20
        $region19: #{residual_block_forward.1} parent=15 // pred_region
          %p204 = scmp.lt.s32.totalorder %s21, 1
          %s205 = scalar_select %p204, %s21, 1
          %s206 = smul.addr %s205, 8
          %s207 = smul.addr %s206, 8
          %s208 = scalar_lea.vmem %s0, %s207
        $region20: #{residual_block_forward.1} parent=15 // pred_fallthru
          _
        // Predicated region
        $region21: #{residual_block_forward.1} parent=15 // pred_check
          %p209 = pneg %p72
        $region22: #{residual_block_forward.1} parent=15 // pred_check_branch
          %211 = sbr.rel (%p209) target = $region24
        $region23: #{residual_block_forward.1} parent=15 // pred_region
          %p212 = scmp.lt.s32.totalorder %s22, 8
          %s213 = scalar_select %p212, %s22, 8
          %s214 = smul.addr %s213, 72
          %s215 = smul.addr %s214, 8
          %s216 = scalar_lea.vmem %s1, %s215
        $region24: #{residual_block_forward.1} parent=15 // pred_fallthru
          _
        // Predicated region
        $region25: #{residual_block_forward.1} parent=15 // pred_check
          %p217 = pneg %p98
        $region26: #{residual_block_forward.1} parent=15 // pred_check_branch
          %219 = sbr.rel (%p217) target = $region28
        $region27: #{residual_block_forward.1} parent=15 // pred_region
          %p220 = scmp.lt.s32.totalorder %s22, 8
          %s221 = scalar_select %p220, %s22, 8
          %s222 = scalar_lea.vmem %s2, %s221
        $region28: #{residual_block_forward.1} parent=15 // pred_fallthru
          _
        // Predicated region
        $region29: #{residual_block_forward.1} parent=15 // pred_check
          %p223 = pneg %p124
        $region30: #{residual_block_forward.1} parent=15 // pred_check_branch
          %225 = sbr.rel (%p223) target = $region32
        $region31: #{residual_block_forward.1} parent=15 // pred_region
          %p226 = scmp.lt.s32.totalorder %s22, 8
          %s227 = scalar_select %p226, %s22, 8
          %s228 = smul.addr %s227, 72
          %s229 = smul.addr %s228, 8
          %s230 = scalar_lea.vmem %s3, %s229
        $region32: #{residual_block_forward.1} parent=15 // pred_fallthru
          _
        // Predicated region
        $region33: #{residual_block_forward.1} parent=15 // pred_check
          %p231 = pneg %p150
        $region34: #{residual_block_forward.1} parent=15 // pred_check_branch
          %233 = sbr.rel (%p231) target = $region36
        $region35: #{residual_block_forward.1} parent=15 // pred_region
          %p234 = scmp.lt.s32.totalorder %s22, 8
          %s235 = scalar_select %p234, %s22, 8
          %s236 = scalar_lea.vmem %s4, %s235
        $region36: #{residual_block_forward.1} parent=15 // pred_fallthru
          _
      $region16: #{residual_block_forward.1} parent=5 // pred_fallthru
        _
      %p237 = scmp.le.s32.totalorder 1, %s14
      %p238 = scmp.lt.s32.totalorder %s14, 19
      %p239 = pnand %p237, %p238
      %p240 = pneg %p239
      // Predicated region
      $region37: #{residual_block_forward.1} parent=5 // pred_check
        _
      $region38: #{residual_block_forward.1} parent=5 // pred_check_branch
        %242 = sbr.rel (%p239) target = $region40
      $region39: #{residual_block_forward.1} parent=5 // pred_region
        %s243 = ssub.s32 %s14, 1
        %p244 = scmp.lt.s32.totalorder %s23, 1
        %s245 = scalar_select %p244, %s23, 1
        %s246 = smul.addr %s245, 8
        %s247 = smul.addr %s246, 8
        %s248 = scalar_lea.vmem %s0, %s247
        %p249 = pneg %p52
        %p250 = pneg %p49
        %p251 = scmp.lt.s32.totalorder %s24, 8
        %s252 = scalar_select %p251, %s24, 8
        %s253 = smul.addr %s252, 72
        %s254 = smul.addr %s253, 8
        %s255 = scalar_lea.vmem %s1, %s254
        %p256 = pneg %p78
        %p257 = pneg %p75
        %p258 = scmp.lt.s32.totalorder %s24, 8
        %s259 = scalar_select %p258, %s24, 8
        %s260 = scalar_lea.vmem %s2, %s259
        %p261 = pneg %p104
        %p262 = pneg %p101
        %p263 = scmp.lt.s32.totalorder %s24, 8
        %s264 = scalar_select %p263, %s24, 8
        %s265 = smul.addr %s264, 72
        %s266 = smul.addr %s265, 8
        %s267 = scalar_lea.vmem %s3, %s266
        %p268 = pneg %p130
        %p269 = pneg %p127
        %p270 = scmp.lt.s32.totalorder %s24, 8
        %s271 = scalar_select %p270, %s24, 8
        %s272 = scalar_lea.vmem %s4, %s271
        %p273 = pneg %p156
        %p274 = pneg %p153
        %p275 = pneg %p182
        %p276 = pneg %p179
        %s277 = sand.u32 %s169, 1
        %s278 = scalar_lea.sflag [#allocation5], %s277
        %s279 = sand.u32 %s169, 1
        %s280 = smul.addr %s279, 64
        %s281 = scalar_lea.vmem [#allocation4], %s280
        %p282 = scmp.lt.s32.totalorder %s23, 1
        %s283 = scalar_select %p282, %s23, 1
        %s284 = smul.addr %s283, 8
        %s285 = smul.addr %s284, 8
        %s286 = scalar_lea.vmem %s0, %s285
        %p287 = scmp.lt.s32.totalorder %s24, 8
        %s288 = scalar_select %p287, %s24, 8
        %s289 = smul.addr %s288, 72
        %s290 = smul.addr %s289, 8
        %s291 = scalar_lea.vmem %s1, %s290
        %p292 = scmp.lt.s32.totalorder %s24, 8
        %s293 = scalar_select %p292, %s24, 8
        %s294 = scalar_lea.vmem %s2, %s293
        %p295 = scmp.lt.s32.totalorder %s24, 8
        %s296 = scalar_select %p295, %s24, 8
        %s297 = smul.addr %s296, 72
        %s298 = smul.addr %s297, 8
        %s299 = scalar_lea.vmem %s3, %s298
        %p300 = scmp.lt.s32.totalorder %s24, 8
        %s301 = scalar_select %p300, %s24, 8
        %s302 = scalar_lea.vmem %s4, %s301
        %p303 = scmp.eq.s32.totalorder %s24, 0
        // Predicated region
        $region41: #{residual_block_forward.1} parent=39 // pred_check
          %p304 = pneg %p303
        $region42: #{residual_block_forward.1} parent=39 // pred_check_branch
          %306 = sbr.rel (%p304) target = $region44
        $region43: #{residual_block_forward.1} parent=39 // pred_region
          %vm307 = vcmask 523264
          %308 = vst.msk [vmem:[#allocation2] sm:$0xff] %vm307, 0.0
          %vm309 = vcmask 517120
          %310 = vst.msk [vmem:[#allocation2 + $0x8] sm:$0x3] %vm309, 0.0
          %311 = vst.msk [vmem:[#allocation2 + $0x10] sm:$0xff] %vm307, 0.0
          %312 = vst.msk [vmem:[#allocation2 + $0x18] sm:$0x3] %vm309, 0.0
          %313 = vst.msk [vmem:[#allocation2 + $0x20] sm:$0xff] %vm307, 0.0
          %314 = vst.msk [vmem:[#allocation2 + $0x28] sm:$0x3] %vm309, 0.0
          %315 = vst.msk [vmem:[#allocation2 + $0x30] sm:$0xff] %vm307, 0.0
          %316 = vst.msk [vmem:[#allocation2 + $0x38] sm:$0x3] %vm309, 0.0
          %317 = vst.msk [vmem:[#allocation2 + $0x40] sm:$0xff] %vm307, 0.0
          %318 = vst.msk [vmem:[#allocation2 + $0x48] sm:$0x3] %vm309, 0.0
          %319 = vst.msk [vmem:[#allocation2 + $0x50] sm:$0xff] %vm307, 0.0
          %320 = vst.msk [vmem:[#allocation2 + $0x58] sm:$0x3] %vm309, 0.0
          %321 = vst.msk [vmem:[#allocation2 + $0x60] sm:$0xff] %vm307, 0.0
          %322 = vst.msk [vmem:[#allocation2 + $0x68] sm:$0x3] %vm309, 0.0
          %323 = vst.msk [vmem:[#allocation2 + $0x70] sm:$0xff] %vm307, 0.0
          %324 = vst.msk [vmem:[#allocation2 + $0x78] sm:$0x3] %vm309, 0.0
          %325 = vst.msk [vmem:[#allocation2 + $0x80] sm:$0xff] %vm307, 0.0
          %326 = vst.msk [vmem:[#allocation2 + $0x88] sm:$0x3] %vm309, 0.0
          %327 = vst.msk [vmem:[#allocation2 + $0x90] sm:$0xff] %vm307, 0.0
          %328 = vst.msk [vmem:[#allocation2 + $0x98] sm:$0x3] %vm309, 0.0
          %v329 = vld [vmem:[%s286] sm:$0xff]
          %v330 = vld [vmem:[%s286 + $0x8] sm:$0xff]
          %v331 = vld [vmem:[%s286 + $0x10] sm:$0xff]
          %v332 = vld [vmem:[%s286 + $0x18] sm:$0xff]
          %v333 = vld [vmem:[%s286 + $0x20] sm:$0xff]
          %v334 = vld [vmem:[%s286 + $0x28] sm:$0xff]
          %v335 = vld [vmem:[%s286 + $0x30] sm:$0xff]
          %v336 = vld [vmem:[%s286 + $0x38] sm:$0xff]
          %s337 = scalar_lea.vmem [#allocation2], 16
          %338 = vst.msk [vmem:[%s337 + $0x1] sm:$0xff] %vm307, %v329
          %339 = vst.msk [vmem:[%s337 + $0x11] sm:$0xff] %vm307, %v330
          %340 = vst.msk [vmem:[%s337 + $0x21] sm:$0xff] %vm307, %v331
          %341 = vst.msk [vmem:[%s337 + $0x31] sm:$0xff] %vm307, %v332
          %342 = vst.msk [vmem:[%s337 + $0x41] sm:$0xff] %vm307, %v333
          %343 = vst.msk [vmem:[%s337 + $0x51] sm:$0xff] %vm307, %v334
          %344 = vst.msk [vmem:[%s337 + $0x61] sm:$0xff] %vm307, %v335
          %345 = vst.msk [vmem:[%s337 + $0x71] sm:$0xff] %vm307, %v336
        $region44: #{residual_block_forward.1} parent=39 // pred_fallthru
          _
        %v346 = vld [vmem:[#allocation2] sm:$0xff]
        %v347 = vld [vmem:[#allocation2 + $0x10] sm:$0xff]
        %v348 = vld [vmem:[#allocation2 + $0x20] sm:$0xff]
        %v349 = vld [vmem:[#allocation2 + $0x30] sm:$0xff]
        %v350 = vld [vmem:[#allocation2 + $0x40] sm:$0xff]
        %v351 = vld [vmem:[#allocation2 + $0x50] sm:$0xff]
        %v352 = vld [vmem:[#allocation2 + $0x60] sm:$0xff]
        %v353 = vld [vmem:[#allocation2 + $0x70] sm:$0xff]
        %vm354 = vcmask 523264
        %355 = vst.msk [vmem:[#allocation3] sm:$0xff] %vm354, %v346
        %356 = vst.msk [vmem:[#allocation3 + $0x28] sm:$0xff] %vm354, %v347
        %357 = vst.msk [vmem:[#allocation3 + $0x50] sm:$0xff] %vm354, %v348
        %358 = vst.msk [vmem:[#allocation3 + $0x78] sm:$0xff] %vm354, %v349
        %359 = vst.msk [vmem:[#allocation3 + $0xa0] sm:$0xff] %vm354, %v350
        %360 = vst.msk [vmem:[#allocation3 + $0xc8] sm:$0xff] %vm354, %v351
        %361 = vst.msk [vmem:[#allocation3 + $0xf0] sm:$0xff] %vm354, %v352
        %362 = vst.msk [vmem:[#allocation3 + $0x118] sm:$0xff] %vm354, %v353
        %v363 = vld [vmem:[#allocation2 + $0x1] sm:$0xff]
        %v364 = vld [vmem:[#allocation2 + $0x11] sm:$0xff]
        %v365 = vld [vmem:[#allocation2 + $0x21] sm:$0xff]
        %v366 = vld [vmem:[#allocation2 + $0x31] sm:$0xff]
        %v367 = vld [vmem:[#allocation2 + $0x41] sm:$0xff]
        %v368 = vld [vmem:[#allocation2 + $0x51] sm:$0xff]
        %v369 = vld [vmem:[#allocation2 + $0x61] sm:$0xff]
        %v370 = vld [vmem:[#allocation2 + $0x71] sm:$0xff]
        %379 = vrot.lane.b32.xlu0 %v363, 64
        %v380 = vpop.permute.xlu0 %379
        %381 = vrot.lane.b32.xlu0 %v364, 64
        %v382 = vpop.permute.xlu0 %381
        %383 = vrot.lane.b32.xlu0 %v365, 64
        %v384 = vpop.permute.xlu0 %383
        %385 = vrot.lane.b32.xlu0 %v366, 64
        %v386 = vpop.permute.xlu0 %385
        %387 = vrot.lane.b32.xlu0 %v367, 64
        %v388 = vpop.permute.xlu0 %387
        %389 = vrot.lane.b32.xlu0 %v368, 64
        %v390 = vpop.permute.xlu0 %389
        %391 = vrot.lane.b32.xlu0 %v369, 64
        %v392 = vpop.permute.xlu0 %391
        %393 = vrot.lane.b32.xlu0 %v370, 64
        %v394 = vpop.permute.xlu0 %393
        %vm403 = vcmask 1048064
        %404 = vst.msk [vmem:[#allocation3] sm:$0xff] %vm403, %v380
        %405 = vst.msk [vmem:[#allocation3 + $0x28] sm:$0xff] %vm403, %v382
        %406 = vst.msk [vmem:[#allocation3 + $0x50] sm:$0xff] %vm403, %v384
        %407 = vst.msk [vmem:[#allocation3 + $0x78] sm:$0xff] %vm403, %v386
        %408 = vst.msk [vmem:[#allocation3 + $0xa0] sm:$0xff] %vm403, %v388
        %409 = vst.msk [vmem:[#allocation3 + $0xc8] sm:$0xff] %vm403, %v390
        %410 = vst.msk [vmem:[#allocation3 + $0xf0] sm:$0xff] %vm403, %v392
        %411 = vst.msk [vmem:[#allocation3 + $0x118] sm:$0xff] %vm403, %v394
        %v412 = vld [vmem:[#allocation2 + $0x2] sm:$0xff]
        %v413 = vld [vmem:[#allocation2 + $0x12] sm:$0xff]
        %v414 = vld [vmem:[#allocation2 + $0x22] sm:$0xff]
        %v415 = vld [vmem:[#allocation2 + $0x32] sm:$0xff]
        %v416 = vld [vmem:[#allocation2 + $0x42] sm:$0xff]
        %v417 = vld [vmem:[#allocation2 + $0x52] sm:$0xff]
        %v418 = vld [vmem:[#allocation2 + $0x62] sm:$0xff]
        %v419 = vld [vmem:[#allocation2 + $0x72] sm:$0xff]
        %420 = vst.msk [vmem:[#allocation3 + $0x8] sm:$0xff] %vm354, %v412
        %421 = vst.msk [vmem:[#allocation3 + $0x30] sm:$0xff] %vm354, %v413
        %422 = vst.msk [vmem:[#allocation3 + $0x58] sm:$0xff] %vm354, %v414
        %423 = vst.msk [vmem:[#allocation3 + $0x80] sm:$0xff] %vm354, %v415
        %424 = vst.msk [vmem:[#allocation3 + $0xa8] sm:$0xff] %vm354, %v416
        %425 = vst.msk [vmem:[#allocation3 + $0xd0] sm:$0xff] %vm354, %v417
        %426 = vst.msk [vmem:[#allocation3 + $0xf8] sm:$0xff] %vm354, %v418
        %427 = vst.msk [vmem:[#allocation3 + $0x120] sm:$0xff] %vm354, %v419
        %s428 = scalar_lea.vmem [#allocation2], 16
        %v429 = vld [vmem:[%s428] sm:$0xff]
        %v430 = vld [vmem:[%s428 + $0x10] sm:$0xff]
        %v431 = vld [vmem:[%s428 + $0x20] sm:$0xff]
        %v432 = vld [vmem:[%s428 + $0x30] sm:$0xff]
        %v433 = vld [vmem:[%s428 + $0x40] sm:$0xff]
        %v434 = vld [vmem:[%s428 + $0x50] sm:$0xff]
        %v435 = vld [vmem:[%s428 + $0x60] sm:$0xff]
        %v436 = vld [vmem:[%s428 + $0x70] sm:$0xff]
        %445 = vrot.lane.b32.xlu0 %v429, 64
        %v446 = vpop.permute.xlu0 %445
        %447 = vrot.lane.b32.xlu0 %v430, 64
        %v448 = vpop.permute.xlu0 %447
        %449 = vrot.lane.b32.xlu0 %v431, 64
        %v450 = vpop.permute.xlu0 %449
        %451 = vrot.lane.b32.xlu0 %v432, 64
        %v452 = vpop.permute.xlu0 %451
        %453 = vrot.lane.b32.xlu0 %v433, 64
        %v454 = vpop.permute.xlu0 %453
        %455 = vrot.lane.b32.xlu0 %v434, 64
        %v456 = vpop.permute.xlu0 %455
        %457 = vrot.lane.b32.xlu0 %v435, 64
        %v458 = vpop.permute.xlu0 %457
        %459 = vrot.lane.b32.xlu0 %v436, 64
        %v460 = vpop.permute.xlu0 %459
        %469 = vst.msk [vmem:[#allocation3 + $0x8] sm:$0xff] %vm403, %v446
        %470 = vst.msk [vmem:[#allocation3 + $0x30] sm:$0xff] %vm403, %v448
        %471 = vst.msk [vmem:[#allocation3 + $0x58] sm:$0xff] %vm403, %v450
        %472 = vst.msk [vmem:[#allocation3 + $0x80] sm:$0xff] %vm403, %v452
        %473 = vst.msk [vmem:[#allocation3 + $0xa8] sm:$0xff] %vm403, %v454
        %474 = vst.msk [vmem:[#allocation3 + $0xd0] sm:$0xff] %vm403, %v456
        %475 = vst.msk [vmem:[#allocation3 + $0xf8] sm:$0xff] %vm403, %v458
        %476 = vst.msk [vmem:[#allocation3 + $0x120] sm:$0xff] %vm403, %v460
        %v477 = vld [vmem:[%s428 + $0x1] sm:$0xff]
        %v478 = vld [vmem:[%s428 + $0x11] sm:$0xff]
        %v479 = vld [vmem:[%s428 + $0x21] sm:$0xff]
        %v480 = vld [vmem:[%s428 + $0x31] sm:$0xff]
        %v481 = vld [vmem:[%s428 + $0x41] sm:$0xff]
        %v482 = vld [vmem:[%s428 + $0x51] sm:$0xff]
        %v483 = vld [vmem:[%s428 + $0x61] sm:$0xff]
        %v484 = vld [vmem:[%s428 + $0x71] sm:$0xff]
        %485 = vst.msk [vmem:[#allocation3 + $0x10] sm:$0xff] %vm354, %v477
        %486 = vst.msk [vmem:[#allocation3 + $0x38] sm:$0xff] %vm354, %v478
        %487 = vst.msk [vmem:[#allocation3 + $0x60] sm:$0xff] %vm354, %v479
        %488 = vst.msk [vmem:[#allocation3 + $0x88] sm:$0xff] %vm354, %v480
        %489 = vst.msk [vmem:[#allocation3 + $0xb0] sm:$0xff] %vm354, %v481
        %490 = vst.msk [vmem:[#allocation3 + $0xd8] sm:$0xff] %vm354, %v482
        %491 = vst.msk [vmem:[#allocation3 + $0x100] sm:$0xff] %vm354, %v483
        %492 = vst.msk [vmem:[#allocation3 + $0x128] sm:$0xff] %vm354, %v484
        %v493 = vld [vmem:[%s428 + $0x2] sm:$0xff]
        %v494 = vld [vmem:[%s428 + $0x12] sm:$0xff]
        %v495 = vld [vmem:[%s428 + $0x22] sm:$0xff]
        %v496 = vld [vmem:[%s428 + $0x32] sm:$0xff]
        %v497 = vld [vmem:[%s428 + $0x42] sm:$0xff]
        %v498 = vld [vmem:[%s428 + $0x52] sm:$0xff]
        %v499 = vld [vmem:[%s428 + $0x62] sm:$0xff]
        %v500 = vld [vmem:[%s428 + $0x72] sm:$0xff]
        %509 = vrot.lane.b32.xlu0 %v493, 64
        %v510 = vpop.permute.xlu0 %509
        %511 = vrot.lane.b32.xlu0 %v494, 64
        %v512 = vpop.permute.xlu0 %511
        %513 = vrot.lane.b32.xlu0 %v495, 64
        %v514 = vpop.permute.xlu0 %513
        %515 = vrot.lane.b32.xlu0 %v496, 64
        %v516 = vpop.permute.xlu0 %515
        %517 = vrot.lane.b32.xlu0 %v497, 64
        %v518 = vpop.permute.xlu0 %517
        %519 = vrot.lane.b32.xlu0 %v498, 64
        %v520 = vpop.permute.xlu0 %519
        %521 = vrot.lane.b32.xlu0 %v499, 64
        %v522 = vpop.permute.xlu0 %521
        %523 = vrot.lane.b32.xlu0 %v500, 64
        %v524 = vpop.permute.xlu0 %523
        %533 = vst.msk [vmem:[#allocation3 + $0x10] sm:$0xff] %vm403, %v510
        %534 = vst.msk [vmem:[#allocation3 + $0x38] sm:$0xff] %vm403, %v512
        %535 = vst.msk [vmem:[#allocation3 + $0x60] sm:$0xff] %vm403, %v514
        %536 = vst.msk [vmem:[#allocation3 + $0x88] sm:$0xff] %vm403, %v516
        %537 = vst.msk [vmem:[#allocation3 + $0xb0] sm:$0xff] %vm403, %v518
        %538 = vst.msk [vmem:[#allocation3 + $0xd8] sm:$0xff] %vm403, %v520
        %539 = vst.msk [vmem:[#allocation3 + $0x100] sm:$0xff] %vm403, %v522
        %540 = vst.msk [vmem:[#allocation3 + $0x128] sm:$0xff] %vm403, %v524
        %s541 = scalar_lea.vmem [#allocation2], 32
        %v542 = vld [vmem:[%s541] sm:$0xff]
        %v543 = vld [vmem:[%s541 + $0x10] sm:$0xff]
        %v544 = vld [vmem:[%s541 + $0x20] sm:$0xff]
        %v545 = vld [vmem:[%s541 + $0x30] sm:$0xff]
        %v546 = vld [vmem:[%s541 + $0x40] sm:$0xff]
        %v547 = vld [vmem:[%s541 + $0x50] sm:$0xff]
        %v548 = vld [vmem:[%s541 + $0x60] sm:$0xff]
        %v549 = vld [vmem:[%s541 + $0x70] sm:$0xff]
        %550 = vst.msk [vmem:[#allocation3 + $0x18] sm:$0xff] %vm354, %v542
        %551 = vst.msk [vmem:[#allocation3 + $0x40] sm:$0xff] %vm354, %v543
        %552 = vst.msk [vmem:[#allocation3 + $0x68] sm:$0xff] %vm354, %v544
        %553 = vst.msk [vmem:[#allocation3 + $0x90] sm:$0xff] %vm354, %v545
        %554 = vst.msk [vmem:[#allocation3 + $0xb8] sm:$0xff] %vm354, %v546
        %555 = vst.msk [vmem:[#allocation3 + $0xe0] sm:$0xff] %vm354, %v547
        %556 = vst.msk [vmem:[#allocation3 + $0x108] sm:$0xff] %vm354, %v548
        %557 = vst.msk [vmem:[#allocation3 + $0x130] sm:$0xff] %vm354, %v549
        %v558 = vld [vmem:[%s541 + $0x1] sm:$0xff]
        %v559 = vld [vmem:[%s541 + $0x11] sm:$0xff]
        %v560 = vld [vmem:[%s541 + $0x21] sm:$0xff]
        %v561 = vld [vmem:[%s541 + $0x31] sm:$0xff]
        %v562 = vld [vmem:[%s541 + $0x41] sm:$0xff]
        %v563 = vld [vmem:[%s541 + $0x51] sm:$0xff]
        %v564 = vld [vmem:[%s541 + $0x61] sm:$0xff]
        %v565 = vld [vmem:[%s541 + $0x71] sm:$0xff]
        %574 = vrot.lane.b32.xlu0 %v558, 64
        %v575 = vpop.permute.xlu0 %574
        %576 = vrot.lane.b32.xlu0 %v559, 64
        %v577 = vpop.permute.xlu0 %576
        %578 = vrot.lane.b32.xlu0 %v560, 64
        %v579 = vpop.permute.xlu0 %578
        %580 = vrot.lane.b32.xlu0 %v561, 64
        %v581 = vpop.permute.xlu0 %580
        %582 = vrot.lane.b32.xlu0 %v562, 64
        %v583 = vpop.permute.xlu0 %582
        %584 = vrot.lane.b32.xlu0 %v563, 64
        %v585 = vpop.permute.xlu0 %584
        %586 = vrot.lane.b32.xlu0 %v564, 64
        %v587 = vpop.permute.xlu0 %586
        %588 = vrot.lane.b32.xlu0 %v565, 64
        %v589 = vpop.permute.xlu0 %588
        %598 = vst.msk [vmem:[#allocation3 + $0x18] sm:$0xff] %vm403, %v575
        %599 = vst.msk [vmem:[#allocation3 + $0x40] sm:$0xff] %vm403, %v577
        %600 = vst.msk [vmem:[#allocation3 + $0x68] sm:$0xff] %vm403, %v579
        %601 = vst.msk [vmem:[#allocation3 + $0x90] sm:$0xff] %vm403, %v581
        %602 = vst.msk [vmem:[#allocation3 + $0xb8] sm:$0xff] %vm403, %v583
        %603 = vst.msk [vmem:[#allocation3 + $0xe0] sm:$0xff] %vm403, %v585
        %604 = vst.msk [vmem:[#allocation3 + $0x108] sm:$0xff] %vm403, %v587
        %605 = vst.msk [vmem:[#allocation3 + $0x130] sm:$0xff] %vm403, %v589
        %v606 = vld [vmem:[%s541 + $0x2] sm:$0xff]
        %v607 = vld [vmem:[%s541 + $0x12] sm:$0xff]
        %v608 = vld [vmem:[%s541 + $0x22] sm:$0xff]
        %v609 = vld [vmem:[%s541 + $0x32] sm:$0xff]
        %v610 = vld [vmem:[%s541 + $0x42] sm:$0xff]
        %v611 = vld [vmem:[%s541 + $0x52] sm:$0xff]
        %v612 = vld [vmem:[%s541 + $0x62] sm:$0xff]
        %v613 = vld [vmem:[%s541 + $0x72] sm:$0xff]
        %614 = vst.msk [vmem:[#allocation3 + $0x20] sm:$0xff] %vm354, %v606
        %615 = vst.msk [vmem:[#allocation3 + $0x48] sm:$0xff] %vm354, %v607
        %616 = vst.msk [vmem:[#allocation3 + $0x70] sm:$0xff] %vm354, %v608
        %617 = vst.msk [vmem:[#allocation3 + $0x98] sm:$0xff] %vm354, %v609
        %618 = vst.msk [vmem:[#allocation3 + $0xc0] sm:$0xff] %vm354, %v610
        %619 = vst.msk [vmem:[#allocation3 + $0xe8] sm:$0xff] %vm354, %v611
        %620 = vst.msk [vmem:[#allocation3 + $0x110] sm:$0xff] %vm354, %v612
        %621 = vst.msk [vmem:[#allocation3 + $0x138] sm:$0xff] %vm354, %v613
        %v622 = vld [vmem:[#allocation3] sm:$0xff]
        %v623 = vld [vmem:[#allocation3 + $0x8] sm:$0xff]
        %v624 = vld [vmem:[#allocation3 + $0x10] sm:$0xff]
        %v625 = vld [vmem:[#allocation3 + $0x18] sm:$0xff]
        %v626 = vld [vmem:[#allocation3 + $0x20] sm:$0xff]
        %v627 = vld [vmem:[#allocation3 + $0x28] sm:$0xff]
        %v628 = vld [vmem:[#allocation3 + $0x30] sm:$0xff]
        %v629 = vld [vmem:[#allocation3 + $0x38] sm:$0xff]
        %v630 = vld [vmem:[#allocation3 + $0x40] sm:$0xff]
        %v631 = vld [vmem:[#allocation3 + $0x48] sm:$0xff]
        %v632 = vld [vmem:[#allocation3 + $0x50] sm:$0xff]
        %v633 = vld [vmem:[#allocation3 + $0x58] sm:$0xff]
        %v634 = vld [vmem:[#allocation3 + $0x60] sm:$0xff]
        %v635 = vld [vmem:[#allocation3 + $0x68] sm:$0xff]
        %v636 = vld [vmem:[#allocation3 + $0x70] sm:$0xff]
        %v637 = vld [vmem:[#allocation3 + $0x78] sm:$0xff]
        %v638 = vld [vmem:[#allocation3 + $0x80] sm:$0xff]
        %v639 = vld [vmem:[#allocation3 + $0x88] sm:$0xff]
        %v640 = vld [vmem:[#allocation3 + $0x90] sm:$0xff]
        %v641 = vld [vmem:[#allocation3 + $0x98] sm:$0xff]
        %v642 = vld [vmem:[#allocation3 + $0xa0] sm:$0xff]
        %v643 = vld [vmem:[#allocation3 + $0xa8] sm:$0xff]
        %v644 = vld [vmem:[#allocation3 + $0xb0] sm:$0xff]
        %v645 = vld [vmem:[#allocation3 + $0xb8] sm:$0xff]
        %v646 = vld [vmem:[#allocation3 + $0xc0] sm:$0xff]
        %v647 = vld [vmem:[#allocation3 + $0xc8] sm:$0xff]
        %v648 = vld [vmem:[#allocation3 + $0xd0] sm:$0xff]
        %v649 = vld [vmem:[#allocation3 + $0xd8] sm:$0xff]
        %v650 = vld [vmem:[#allocation3 + $0xe0] sm:$0xff]
        %v651 = vld [vmem:[#allocation3 + $0xe8] sm:$0xff]
        %v652 = vld [vmem:[#allocation3 + $0xf0] sm:$0xff]
        %v653 = vld [vmem:[#allocation3 + $0xf8] sm:$0xff]
        %v654 = vld [vmem:[#allocation3 + $0x100] sm:$0xff]
        %v655 = vld [vmem:[#allocation3 + $0x108] sm:$0xff]
        %v656 = vld [vmem:[#allocation3 + $0x110] sm:$0xff]
        %v657 = vld [vmem:[#allocation3 + $0x118] sm:$0xff]
        %v658 = vld [vmem:[#allocation3 + $0x120] sm:$0xff]
        %v659 = vld [vmem:[#allocation3 + $0x128] sm:$0xff]
        %v660 = vld [vmem:[#allocation3 + $0x130] sm:$0xff]
        %v661 = vld [vmem:[#allocation3 + $0x138] sm:$0xff]
        %v662 = vld [vmem:[%s291] sm:$0xff]
        %v663 = vld [vmem:[%s291 + $0x8] sm:$0xff]
        %v664 = vld [vmem:[%s291 + $0x10] sm:$0xff]
        %v665 = vld [vmem:[%s291 + $0x18] sm:$0xff]
        %v666 = vld [vmem:[%s291 + $0x20] sm:$0xff]
        %v667 = vld [vmem:[%s291 + $0x28] sm:$0xff]
        %v668 = vld [vmem:[%s291 + $0x30] sm:$0xff]
        %v669 = vld [vmem:[%s291 + $0x38] sm:$0xff]
        %v670 = vld [vmem:[%s291 + $0x40] sm:$0xff]
        %v671 = vld [vmem:[%s291 + $0x48] sm:$0xff]
        %v672 = vld [vmem:[%s291 + $0x50] sm:$0xff]
        %v673 = vld [vmem:[%s291 + $0x58] sm:$0xff]
        %v674 = vld [vmem:[%s291 + $0x60] sm:$0xff]
        %v675 = vld [vmem:[%s291 + $0x68] sm:$0xff]
        %v676 = vld [vmem:[%s291 + $0x70] sm:$0xff]
        %v677 = vld [vmem:[%s291 + $0x78] sm:$0xff]
        %v678 = vld [vmem:[%s291 + $0x80] sm:$0xff]
        %v679 = vld [vmem:[%s291 + $0x88] sm:$0xff]
        %v680 = vld [vmem:[%s291 + $0x90] sm:$0xff]
        %v681 = vld [vmem:[%s291 + $0x98] sm:$0xff]
        %v682 = vld [vmem:[%s291 + $0xa0] sm:$0xff]
        %v683 = vld [vmem:[%s291 + $0xa8] sm:$0xff]
        %v684 = vld [vmem:[%s291 + $0xb0] sm:$0xff]
        %v685 = vld [vmem:[%s291 + $0xb8] sm:$0xff]
        %v686 = vld [vmem:[%s291 + $0xc0] sm:$0xff]
        %v687 = vld [vmem:[%s291 + $0xc8] sm:$0xff]
        %v688 = vld [vmem:[%s291 + $0xd0] sm:$0xff]
        %v689 = vld [vmem:[%s291 + $0xd8] sm:$0xff]
        %v690 = vld [vmem:[%s291 + $0xe0] sm:$0xff]
        %v691 = vld [vmem:[%s291 + $0xe8] sm:$0xff]
        %v692 = vld [vmem:[%s291 + $0xf0] sm:$0xff]
        %v693 = vld [vmem:[%s291 + $0xf8] sm:$0xff]
        %v694 = vld [vmem:[%s291 + $0x100] sm:$0xff]
        %v695 = vld [vmem:[%s291 + $0x108] sm:$0xff]
        %v696 = vld [vmem:[%s291 + $0x110] sm:$0xff]
        %v697 = vld [vmem:[%s291 + $0x118] sm:$0xff]
        %v698 = vld [vmem:[%s291 + $0x120] sm:$0xff]
        %v699 = vld [vmem:[%s291 + $0x128] sm:$0xff]
        %v700 = vld [vmem:[%s291 + $0x130] sm:$0xff]
        %v701 = vld [vmem:[%s291 + $0x138] sm:$0xff]
        %v702 = vld [vmem:[%s291 + $0x140] sm:$0xff]
        %v703 = vld [vmem:[%s291 + $0x148] sm:$0xff]
        %v704 = vld [vmem:[%s291 + $0x150] sm:$0xff]
        %v705 = vld [vmem:[%s291 + $0x158] sm:$0xff]
        %v706 = vld [vmem:[%s291 + $0x160] sm:$0xff]
        %v707 = vld [vmem:[%s291 + $0x168] sm:$0xff]
        %v708 = vld [vmem:[%s291 + $0x170] sm:$0xff]
        %v709 = vld [vmem:[%s291 + $0x178] sm:$0xff]
        %v710 = vld [vmem:[%s291 + $0x180] sm:$0xff]
        %v711 = vld [vmem:[%s291 + $0x188] sm:$0xff]
        %v712 = vld [vmem:[%s291 + $0x190] sm:$0xff]
        %v713 = vld [vmem:[%s291 + $0x198] sm:$0xff]
        %v714 = vld [vmem:[%s291 + $0x1a0] sm:$0xff]
        %v715 = vld [vmem:[%s291 + $0x1a8] sm:$0xff]
        %v716 = vld [vmem:[%s291 + $0x1b0] sm:$0xff]
        %v717 = vld [vmem:[%s291 + $0x1b8] sm:$0xff]
        %v718 = vld [vmem:[%s291 + $0x1c0] sm:$0xff]
        %v719 = vld [vmem:[%s291 + $0x1c8] sm:$0xff]
        %v720 = vld [vmem:[%s291 + $0x1d0] sm:$0xff]
        %v721 = vld [vmem:[%s291 + $0x1d8] sm:$0xff]
        %v722 = vld [vmem:[%s291 + $0x1e0] sm:$0xff]
        %v723 = vld [vmem:[%s291 + $0x1e8] sm:$0xff]
        %v724 = vld [vmem:[%s291 + $0x1f0] sm:$0xff]
        %v725 = vld [vmem:[%s291 + $0x1f8] sm:$0xff]
        %v726 = vld [vmem:[%s291 + $0x200] sm:$0xff]
        %v727 = vld [vmem:[%s291 + $0x208] sm:$0xff]
        %v728 = vld [vmem:[%s291 + $0x210] sm:$0xff]
        %v729 = vld [vmem:[%s291 + $0x218] sm:$0xff]
        %v730 = vld [vmem:[%s291 + $0x220] sm:$0xff]
        %v731 = vld [vmem:[%s291 + $0x228] sm:$0xff]
        %v732 = vld [vmem:[%s291 + $0x230] sm:$0xff]
        %v733 = vld [vmem:[%s291 + $0x238] sm:$0xff]
        %v734 = vld [vmem:[%s294] sm:$0x1]
        %v736 = vlaneseq
        %v737 = vshrl.u32 %v736, 7
        %v738 = vsub.s32 0, %v737
        %v739 = vrot.slane %v734, %v738
        %v742 = vsel %vm354, %v626, 0
        %v745 = vsel %vm354, %v631, 0
        %v748 = vsel %vm354, %v636, 0
        %v751 = vsel %vm354, %v641, 0
        %v754 = vsel %vm354, %v646, 0
        %v757 = vsel %vm354, %v651, 0
        %v760 = vsel %vm354, %v656, 0
        %v763 = vsel %vm354, %v661, 0
        %765 = vmatprep.subr.mxu0 0.0
        %766 = vmatpush1.msra.mxu0 %v662
        %767 = vmatprep.subr.mxu0 0.0
        %768 = vmatpush1.msra.mxu0 %v663
        %769 = vmatprep.subr.mxu0 0.0
        %770 = vmatpush1.msra.mxu0 %v664
        %771 = vmatprep.subr.mxu0 0.0
        %772 = vmatpush1.msra.mxu0 %v665
        %773 = vmatprep.subr.mxu0 0.0
        %774 = vmatpush1.msra.mxu0 %v666
        %775 = vmatprep.subr.mxu0 0.0
        %776 = vmatpush1.msra.mxu0 %v667
        %777 = vmatprep.subr.mxu0 0.0
        %778 = vmatpush1.msra.mxu0 %v668
        %779 = vmatprep.subr.mxu0 0.0
        %780 = vmatpush1.msra.mxu0 %v669
        %781 = vmatprep.subr.mxu0 0.0
        %782 = vmatpush1.msra.mxu0 %v670
        %783 = vmatprep.subr.mxu0 0.0
        %784 = vmatpush1.msra.mxu0 %v671
        %785 = vmatprep.subr.mxu0 0.0
        %786 = vmatpush1.msra.mxu0 %v672
        %787 = vmatprep.subr.mxu0 0.0
        %788 = vmatpush1.msra.mxu0 %v673
        %789 = vmatprep.subr.mxu0 0.0
        %790 = vmatpush1.msra.mxu0 %v674
        %791 = vmatprep.subr.mxu0 0.0
        %792 = vmatpush1.msra.mxu0 %v675
        %793 = vmatprep.subr.mxu0 0.0
        %794 = vmatpush1.msra.mxu0 %v676
        %795 = vmatprep.subr.mxu0 0.0
        %796 = vmatpush1.msra.mxu0 %v677
        %797 = vmatprep.subr.mxu0 0.0
        %798 = vmatpush1.msra.mxu0 %v678
        %799 = vmatprep.subr.mxu0 0.0
        %800 = vmatpush1.msra.mxu0 %v679
        %801 = vmatprep.subr.mxu0 0.0
        %802 = vmatpush1.msra.mxu0 %v680
        %803 = vmatprep.subr.mxu0 0.0
        %804 = vmatpush1.msra.mxu0 %v681
        %805 = vmatprep.subr.mxu0 0.0
        %806 = vmatpush1.msra.mxu0 %v682
        %807 = vmatprep.subr.mxu0 0.0
        %808 = vmatpush1.msra.mxu0 %v683
        %809 = vmatprep.subr.mxu0 0.0
        %810 = vmatpush1.msra.mxu0 %v684
        %811 = vmatprep.subr.mxu0 0.0
        %812 = vmatpush1.msra.mxu0 %v685
        %813 = vmatprep.subr.mxu0 0.0
        %814 = vmatpush1.msra.mxu0 %v686
        %815 = vmatprep.subr.mxu0 0.0
        %816 = vmatpush1.msra.mxu0 %v687
        %817 = vmatprep.subr.mxu0 0.0
        %818 = vmatpush1.msra.mxu0 %v688
        %819 = vmatprep.subr.mxu0 0.0
        %820 = vmatpush1.msra.mxu0 %v689
        %821 = vmatprep.subr.mxu0 0.0
        %822 = vmatpush1.msra.mxu0 %v690
        %823 = vmatprep.subr.mxu0 0.0
        %824 = vmatpush1.msra.mxu0 %v691
        %825 = vmatprep.subr.mxu0 0.0
        %826 = vmatpush1.msra.mxu0 %v692
        %827 = vmatprep.subr.mxu0 0.0
        %828 = vmatpush1.msra.mxu0 %v693
        %829 = vmatprep.mubr.f32.mxu0 %v623
        %830 = vmatmul.mubr.f32.gmra.mrb[0].mxu0 %v622
        %v831 = vpop.f32.mrb[0].mxu0
        %v832 = vadd.f32 %v739, %v831
        %v833 = vpop.f32.mrb[0].mxu0
        %834 = vmatprep.mubr.f32.mxu0 %v628
        %835 = vmatmul.mubr.f32.gmra.mrb[0].mxu0 %v627
        %v836 = vpop.f32.mrb[0].mxu0
        %v837 = vadd.f32 %v739, %v836
        %v838 = vpop.f32.mrb[0].mxu0
        %839 = vmatprep.mubr.f32.mxu0 %v633
        %840 = vmatmul.mubr.f32.gmra.mrb[0].mxu0 %v632
        %v841 = vpop.f32.mrb[0].mxu0
        %v842 = vadd.f32 %v739, %v841
        %v843 = vpop.f32.mrb[0].mxu0
        %844 = vmatprep.mubr.f32.mxu0 %v638
        %845 = vmatmul.mubr.f32.gmra.mrb[0].mxu0 %v637
        %v846 = vpop.f32.mrb[0].mxu0
        %v847 = vadd.f32 %v739, %v846
        %v848 = vpop.f32.mrb[0].mxu0
        %849 = vmatprep.mubr.f32.mxu0 %v643
        %850 = vmatmul.mubr.f32.gmra.mrb[0].mxu0 %v642
        %v851 = vpop.f32.mrb[0].mxu0
        %v852 = vadd.f32 %v739, %v851
        %v853 = vpop.f32.mrb[0].mxu0
        %854 = vmatprep.mubr.f32.mxu0 %v648
        %855 = vmatmul.mubr.f32.gmra.mrb[0].mxu0 %v647
        %v856 = vpop.f32.mrb[0].mxu0
        %v857 = vadd.f32 %v739, %v856
        %v858 = vpop.f32.mrb[0].mxu0
        %859 = vmatprep.mubr.f32.mxu0 %v653
        %860 = vmatmul.mubr.f32.gmra.mrb[0].mxu0 %v652
        %v861 = vpop.f32.mrb[0].mxu0
        %v862 = vadd.f32 %v739, %v861
        %v863 = vpop.f32.mrb[0].mxu0
        %864 = vmatprep.mubr.f32.mxu0 %v658
        %865 = vmatmul.mubr.f32.gmra.mrb[0].mxu0 %v657
        %v866 = vpop.f32.mrb[0].mxu0
        %v867 = vadd.f32 %v739, %v866
        %v868 = vpop.f32.mrb[0].mxu0
        %869 = vdwg.mxu0
        %870 = vmatprep.subr.mxu0 0.0
        %871 = vmatpush1.msra.mxu0 %v694
        %872 = vmatprep.subr.mxu0 0.0
        %873 = vmatpush1.msra.mxu0 %v695
        %874 = vmatprep.subr.mxu0 0.0
        %875 = vmatpush1.msra.mxu0 %v696
        %876 = vmatprep.subr.mxu0 0.0
        %877 = vmatpush1.msra.mxu0 %v697
        %878 = vmatprep.subr.mxu0 0.0
        %879 = vmatpush1.msra.mxu0 %v698
        %880 = vmatprep.subr.mxu0 0.0
        %881 = vmatpush1.msra.mxu0 %v699
        %882 = vmatprep.subr.mxu0 0.0
        %883 = vmatpush1.msra.mxu0 %v700
        %884 = vmatprep.subr.mxu0 0.0
        %885 = vmatpush1.msra.mxu0 %v701
        %886 = vmatprep.subr.mxu0 0.0
        %887 = vmatpush1.msra.mxu0 %v702
        %888 = vmatprep.subr.mxu0 0.0
        %889 = vmatpush1.msra.mxu0 %v703
        %890 = vmatprep.subr.mxu0 0.0
        %891 = vmatpush1.msra.mxu0 %v704
        %892 = vmatprep.subr.mxu0 0.0
        %893 = vmatpush1.msra.mxu0 %v705
        %894 = vmatprep.subr.mxu0 0.0
        %895 = vmatpush1.msra.mxu0 %v706
        %896 = vmatprep.subr.mxu0 0.0
        %897 = vmatpush1.msra.mxu0 %v707
        %898 = vmatprep.subr.mxu0 0.0
        %899 = vmatpush1.msra.mxu0 %v708
        %900 = vmatprep.subr.mxu0 0.0
        %901 = vmatpush1.msra.mxu0 %v709
        %902 = vmatprep.subr.mxu0 0.0
        %903 = vmatpush1.msra.mxu0 %v710
        %904 = vmatprep.subr.mxu0 0.0
        %905 = vmatpush1.msra.mxu0 %v711
        %906 = vmatprep.subr.mxu0 0.0
        %907 = vmatpush1.msra.mxu0 %v712
        %908 = vmatprep.subr.mxu0 0.0
        %909 = vmatpush1.msra.mxu0 %v713
        %910 = vmatprep.subr.mxu0 0.0
        %911 = vmatpush1.msra.mxu0 %v714
        %912 = vmatprep.subr.mxu0 0.0
        %913 = vmatpush1.msra.mxu0 %v715
        %914 = vmatprep.subr.mxu0 0.0
        %915 = vmatpush1.msra.mxu0 %v716
        %916 = vmatprep.subr.mxu0 0.0
        %917 = vmatpush1.msra.mxu0 %v717
        %918 = vmatprep.subr.mxu0 0.0
        %919 = vmatpush1.msra.mxu0 %v718
        %920 = vmatprep.subr.mxu0 0.0
        %921 = vmatpush1.msra.mxu0 %v719
        %922 = vmatprep.subr.mxu0 0.0
        %923 = vmatpush1.msra.mxu0 %v720
        %924 = vmatprep.subr.mxu0 0.0
        %925 = vmatpush1.msra.mxu0 %v721
        %926 = vmatprep.subr.mxu0 0.0
        %927 = vmatpush1.msra.mxu0 %v722
        %928 = vmatprep.subr.mxu0 0.0
        %929 = vmatpush1.msra.mxu0 %v723
        %930 = vmatprep.subr.mxu0 0.0
        %931 = vmatpush1.msra.mxu0 %v724
        %932 = vmatprep.subr.mxu0 0.0
        %933 = vmatpush1.msra.mxu0 %v725
        %934 = vmatprep.mubr.f32.mxu0 %v625
        %935 = vmatmul.mubr.f32.gmra.mrb[0].mxu0 %v624
        %v936 = vpop.f32.mrb[0].mxu0
        %v937 = vadd.f32 %v832, %v936
        %v938 = vpop.f32.mrb[0].mxu0
        %939 = vmatprep.mubr.f32.mxu0 %v630
        %940 = vmatmul.mubr.f32.gmra.mrb[0].mxu0 %v629
        %v941 = vpop.f32.mrb[0].mxu0
        %v942 = vadd.f32 %v837, %v941
        %v943 = vpop.f32.mrb[0].mxu0
        %944 = vmatprep.mubr.f32.mxu0 %v635
        %945 = vmatmul.mubr.f32.gmra.mrb[0].mxu0 %v634
        %v946 = vpop.f32.mrb[0].mxu0
        %v947 = vadd.f32 %v842, %v946
        %v948 = vpop.f32.mrb[0].mxu0
        %949 = vmatprep.mubr.f32.mxu0 %v640
        %950 = vmatmul.mubr.f32.gmra.mrb[0].mxu0 %v639
        %v951 = vpop.f32.mrb[0].mxu0
        %v952 = vadd.f32 %v847, %v951
        %v953 = vpop.f32.mrb[0].mxu0
        %954 = vmatprep.mubr.f32.mxu0 %v645
        %955 = vmatmul.mubr.f32.gmra.mrb[0].mxu0 %v644
        %v956 = vpop.f32.mrb[0].mxu0
        %v957 = vadd.f32 %v852, %v956
        %v958 = vpop.f32.mrb[0].mxu0
        %959 = vmatprep.mubr.f32.mxu0 %v650
        %960 = vmatmul.mubr.f32.gmra.mrb[0].mxu0 %v649
        %v961 = vpop.f32.mrb[0].mxu0
        %v962 = vadd.f32 %v857, %v961
        %v963 = vpop.f32.mrb[0].mxu0
        %964 = vmatprep.mubr.f32.mxu0 %v655
        %965 = vmatmul.mubr.f32.gmra.mrb[0].mxu0 %v654
        %v966 = vpop.f32.mrb[0].mxu0
        %v967 = vadd.f32 %v862, %v966
        %v968 = vpop.f32.mrb[0].mxu0
        %969 = vmatprep.mubr.f32.mxu0 %v660
        %970 = vmatmul.mubr.f32.gmra.mrb[0].mxu0 %v659
        %v971 = vpop.f32.mrb[0].mxu0
        %v972 = vadd.f32 %v867, %v971
        %v973 = vpop.f32.mrb[0].mxu0
        %974 = vdwg.mxu0
        %975 = vmatprep.subr.mxu0 0.0
        %976 = vmatpush1.msra.mxu0 %v726
        %977 = vmatprep.subr.mxu0 0.0
        %978 = vmatpush1.msra.mxu0 %v727
        %979 = vmatprep.subr.mxu0 0.0
        %980 = vmatpush1.msra.mxu0 %v728
        %981 = vmatprep.subr.mxu0 0.0
        %982 = vmatpush1.msra.mxu0 %v729
        %983 = vmatprep.subr.mxu0 0.0
        %984 = vmatpush1.msra.mxu0 %v730
        %985 = vmatprep.subr.mxu0 0.0
        %986 = vmatpush1.msra.mxu0 %v731
        %987 = vmatprep.subr.mxu0 0.0
        %988 = vmatpush1.msra.mxu0 %v732
        %989 = vmatprep.subr.mxu0 0.0
        %990 = vmatpush1.msra.mxu0 %v733
        %991 = vmatprep.subr.mxu0 0.0
        %992 = vmatpush1.msra.mxu0 0.0
        %993 = vmatprep.subr.mxu0 0.0
        %994 = vmatpush1.msra.mxu0 0.0
        %995 = vmatprep.subr.mxu0 0.0
        %996 = vmatpush1.msra.mxu0 0.0
        %997 = vmatprep.subr.mxu0 0.0
        %998 = vmatpush1.msra.mxu0 0.0
        %999 = vmatprep.subr.mxu0 0.0
        %1000 = vmatpush1.msra.mxu0 0.0
        %1001 = vmatprep.subr.mxu0 0.0
        %1002 = vmatpush1.msra.mxu0 0.0
        %1003 = vmatprep.subr.mxu0 0.0
        %1004 = vmatpush1.msra.mxu0 0.0
        %1005 = vmatprep.subr.mxu0 0.0
        %1006 = vmatpush1.msra.mxu0 0.0
        %1007 = vmatprep.subr.mxu0 0.0
        %1008 = vmatpush1.msra.mxu0 0.0
        %1009 = vmatprep.subr.mxu0 0.0
        %1010 = vmatpush1.msra.mxu0 0.0
        %1011 = vmatprep.subr.mxu0 0.0
        %1012 = vmatpush1.msra.mxu0 0.0
        %1013 = vmatprep.subr.mxu0 0.0
        %1014 = vmatpush1.msra.mxu0 0.0
        %1015 = vmatprep.subr.mxu0 0.0
        %1016 = vmatpush1.msra.mxu0 0.0
        %1017 = vmatprep.subr.mxu0 0.0
        %1018 = vmatpush1.msra.mxu0 0.0
        %1019 = vmatprep.subr.mxu0 0.0
        %1020 = vmatpush1.msra.mxu0 0.0
        %1021 = vmatprep.subr.mxu0 0.0
        %1022 = vmatpush1.msra.mxu0 0.0
        %1023 = vmatprep.subr.mxu0 0.0
        %1024 = vmatpush1.msra.mxu0 0.0
        %1025 = vmatprep.subr.mxu0 0.0
        %1026 = vmatpush1.msra.mxu0 0.0
        %1027 = vmatprep.subr.mxu0 0.0
        %1028 = vmatpush1.msra.mxu0 0.0
        %1029 = vmatprep.subr.mxu0 0.0
        %1030 = vmatpush1.msra.mxu0 0.0
        %1031 = vmatprep.subr.mxu0 0.0
        %1032 = vmatpush1.msra.mxu0 0.0
        %1033 = vmatprep.subr.mxu0 0.0
        %1034 = vmatpush1.msra.mxu0 0.0
        %1035 = vmatprep.subr.mxu0 0.0
        %1036 = vmatpush1.msra.mxu0 0.0
        %1037 = vmatprep.subr.mxu0 0.0
        %1038 = vmatpush1.msra.mxu0 0.0
        %1039 = vmatprep.mubr.f32.mxu0 0.0
        %1040 = vmatmul.mubr.f32.gmra.mrb[0].mxu0 %v742
        %v1041 = vpop.f32.mrb[0].mxu0
        %v1042 = vadd.f32 %v937, %v1041
        %v1043 = vpop.f32.mrb[0].mxu0
        %1044 = vmatprep.mubr.f32.mxu0 0.0
        %1045 = vmatmul.mubr.f32.gmra.mrb[0].mxu0 %v745
        %v1046 = vpop.f32.mrb[0].mxu0
        %v1047 = vadd.f32 %v942, %v1046
        %v1048 = vpop.f32.mrb[0].mxu0
        %1049 = vmatprep.mubr.f32.mxu0 0.0
        %1050 = vmatmul.mubr.f32.gmra.mrb[0].mxu0 %v748
        %v1051 = vpop.f32.mrb[0].mxu0
        %v1052 = vadd.f32 %v947, %v1051
        %v1053 = vpop.f32.mrb[0].mxu0
        %1054 = vmatprep.mubr.f32.mxu0 0.0
        %1055 = vmatmul.mubr.f32.gmra.mrb[0].mxu0 %v751
        %v1056 = vpop.f32.mrb[0].mxu0
        %v1057 = vadd.f32 %v952, %v1056
        %v1058 = vpop.f32.mrb[0].mxu0
        %1059 = vmatprep.mubr.f32.mxu0 0.0
        %1060 = vmatmul.mubr.f32.gmra.mrb[0].mxu0 %v754
        %v1061 = vpop.f32.mrb[0].mxu0
        %v1062 = vadd.f32 %v957, %v1061
        %v1063 = vpop.f32.mrb[0].mxu0
        %1064 = vmatprep.mubr.f32.mxu0 0.0
        %1065 = vmatmul.mubr.f32.gmra.mrb[0].mxu0 %v757
        %v1066 = vpop.f32.mrb[0].mxu0
        %v1067 = vadd.f32 %v962, %v1066
        %v1068 = vpop.f32.mrb[0].mxu0
        %1069 = vmatprep.mubr.f32.mxu0 0.0
        %1070 = vmatmul.mubr.f32.gmra.mrb[0].mxu0 %v760
        %v1071 = vpop.f32.mrb[0].mxu0
        %v1072 = vadd.f32 %v967, %v1071
        %v1073 = vpop.f32.mrb[0].mxu0
        %1074 = vmatprep.mubr.f32.mxu0 0.0
        %1075 = vmatmul.mubr.f32.gmra.mrb[0].mxu0 %v763
        %v1076 = vpop.f32.mrb[0].mxu0
        %v1077 = vadd.f32 %v972, %v1076
        %v1078 = vpop.f32.mrb[0].mxu0
        %1079 = vdwg.mxu0
        %v1080 = vmax.f32 %v1042, 0.0
        %v1081 = vmax.f32 %v1047, 0.0
        %v1082 = vmax.f32 %v1052, 0.0
        %v1083 = vmax.f32 %v1057, 0.0
        %v1084 = vmax.f32 %v1062, 0.0
        %v1085 = vmax.f32 %v1067, 0.0
        %v1086 = vmax.f32 %v1072, 0.0
        %v1087 = vmax.f32 %v1077, 0.0
        %1088 = vst.msk [vmem:[%s428 + $0x1] sm:$0xff] %vm354, %v1080
        %1089 = vst.msk [vmem:[%s428 + $0x11] sm:$0xff] %vm354, %v1081
        %1090 = vst.msk [vmem:[%s428 + $0x21] sm:$0xff] %vm354, %v1082
        %1091 = vst.msk [vmem:[%s428 + $0x31] sm:$0xff] %vm354, %v1083
        %1092 = vst.msk [vmem:[%s428 + $0x41] sm:$0xff] %vm354, %v1084
        %1093 = vst.msk [vmem:[%s428 + $0x51] sm:$0xff] %vm354, %v1085
        %1094 = vst.msk [vmem:[%s428 + $0x61] sm:$0xff] %vm354, %v1086
        %1095 = vst.msk [vmem:[%s428 + $0x71] sm:$0xff] %vm354, %v1087
        %v1096 = vld [vmem:[#allocation2] sm:$0xff]
        %v1097 = vld [vmem:[#allocation2 + $0x10] sm:$0xff]
        %v1098 = vld [vmem:[#allocation2 + $0x20] sm:$0xff]
        %v1099 = vld [vmem:[#allocation2 + $0x30] sm:$0xff]
        %v1100 = vld [vmem:[#allocation2 + $0x40] sm:$0xff]
        %v1101 = vld [vmem:[#allocation2 + $0x50] sm:$0xff]
        %v1102 = vld [vmem:[#allocation2 + $0x60] sm:$0xff]
        %v1103 = vld [vmem:[#allocation2 + $0x70] sm:$0xff]
        %1104 = vst.msk [vmem:[#allocation3] sm:$0xff] %vm354, %v1096
        %1105 = vst.msk [vmem:[#allocation3 + $0x28] sm:$0xff] %vm354, %v1097
        %1106 = vst.msk [vmem:[#allocation3 + $0x50] sm:$0xff] %vm354, %v1098
        %1107 = vst.msk [vmem:[#allocation3 + $0x78] sm:$0xff] %vm354, %v1099
        %1108 = vst.msk [vmem:[#allocation3 + $0xa0] sm:$0xff] %vm354, %v1100
        %1109 = vst.msk [vmem:[#allocation3 + $0xc8] sm:$0xff] %vm354, %v1101
        %1110 = vst.msk [vmem:[#allocation3 + $0xf0] sm:$0xff] %vm354, %v1102
        %1111 = vst.msk [vmem:[#allocation3 + $0x118] sm:$0xff] %vm354, %v1103
        %v1112 = vld [vmem:[#allocation2 + $0x1] sm:$0xff]
        %v1113 = vld [vmem:[#allocation2 + $0x11] sm:$0xff]
        %v1114 = vld [vmem:[#allocation2 + $0x21] sm:$0xff]
        %v1115 = vld [vmem:[#allocation2 + $0x31] sm:$0xff]
        %v1116 = vld [vmem:[#allocation2 + $0x41] sm:$0xff]
        %v1117 = vld [vmem:[#allocation2 + $0x51] sm:$0xff]
        %v1118 = vld [vmem:[#allocation2 + $0x61] sm:$0xff]
        %v1119 = vld [vmem:[#allocation2 + $0x71] sm:$0xff]
        %1128 = vrot.lane.b32.xlu0 %v1112, 64
        %v1129 = vpop.permute.xlu0 %1128
        %1130 = vrot.lane.b32.xlu0 %v1113, 64
        %v1131 = vpop.permute.xlu0 %1130
        %1132 = vrot.lane.b32.xlu0 %v1114, 64
        %v1133 = vpop.permute.xlu0 %1132
        %1134 = vrot.lane.b32.xlu0 %v1115, 64
        %v1135 = vpop.permute.xlu0 %1134
        %1136 = vrot.lane.b32.xlu0 %v1116, 64
        %v1137 = vpop.permute.xlu0 %1136
        %1138 = vrot.lane.b32.xlu0 %v1117, 64
        %v1139 = vpop.permute.xlu0 %1138
        %1140 = vrot.lane.b32.xlu0 %v1118, 64
        %v1141 = vpop.permute.xlu0 %1140
        %1142 = vrot.lane.b32.xlu0 %v1119, 64
        %v1143 = vpop.permute.xlu0 %1142
        %1152 = vst.msk [vmem:[#allocation3] sm:$0xff] %vm403, %v1129
        %1153 = vst.msk [vmem:[#allocation3 + $0x28] sm:$0xff] %vm403, %v1131
        %1154 = vst.msk [vmem:[#allocation3 + $0x50] sm:$0xff] %vm403, %v1133
        %1155 = vst.msk [vmem:[#allocation3 + $0x78] sm:$0xff] %vm403, %v1135
        %1156 = vst.msk [vmem:[#allocation3 + $0xa0] sm:$0xff] %vm403, %v1137
        %1157 = vst.msk [vmem:[#allocation3 + $0xc8] sm:$0xff] %vm403, %v1139
        %1158 = vst.msk [vmem:[#allocation3 + $0xf0] sm:$0xff] %vm403, %v1141
        %1159 = vst.msk [vmem:[#allocation3 + $0x118] sm:$0xff] %vm403, %v1143
        %v1160 = vld [vmem:[#allocation2 + $0x2] sm:$0xff]
        %v1161 = vld [vmem:[#allocation2 + $0x12] sm:$0xff]
        %v1162 = vld [vmem:[#allocation2 + $0x22] sm:$0xff]
        %v1163 = vld [vmem:[#allocation2 + $0x32] sm:$0xff]
        %v1164 = vld [vmem:[#allocation2 + $0x42] sm:$0xff]
        %v1165 = vld [vmem:[#allocation2 + $0x52] sm:$0xff]
        %v1166 = vld [vmem:[#allocation2 + $0x62] sm:$0xff]
        %v1167 = vld [vmem:[#allocation2 + $0x72] sm:$0xff]
        %1168 = vst.msk [vmem:[#allocation3 + $0x8] sm:$0xff] %vm354, %v1160
        %1169 = vst.msk [vmem:[#allocation3 + $0x30] sm:$0xff] %vm354, %v1161
        %1170 = vst.msk [vmem:[#allocation3 + $0x58] sm:$0xff] %vm354, %v1162
        %1171 = vst.msk [vmem:[#allocation3 + $0x80] sm:$0xff] %vm354, %v1163
        %1172 = vst.msk [vmem:[#allocation3 + $0xa8] sm:$0xff] %vm354, %v1164
        %1173 = vst.msk [vmem:[#allocation3 + $0xd0] sm:$0xff] %vm354, %v1165
        %1174 = vst.msk [vmem:[#allocation3 + $0xf8] sm:$0xff] %vm354, %v1166
        %1175 = vst.msk [vmem:[#allocation3 + $0x120] sm:$0xff] %vm354, %v1167
        %v1176 = vld [vmem:[%s428] sm:$0xff]
        %v1177 = vld [vmem:[%s428 + $0x10] sm:$0xff]
        %v1178 = vld [vmem:[%s428 + $0x20] sm:$0xff]
        %v1179 = vld [vmem:[%s428 + $0x30] sm:$0xff]
        %v1180 = vld [vmem:[%s428 + $0x40] sm:$0xff]
        %v1181 = vld [vmem:[%s428 + $0x50] sm:$0xff]
        %v1182 = vld [vmem:[%s428 + $0x60] sm:$0xff]
        %v1183 = vld [vmem:[%s428 + $0x70] sm:$0xff]
        %1192 = vrot.lane.b32.xlu0 %v1176, 64
        %v1193 = vpop.permute.xlu0 %1192
        %1194 = vrot.lane.b32.xlu0 %v1177, 64
        %v1195 = vpop.permute.xlu0 %1194
        %1196 = vrot.lane.b32.xlu0 %v1178, 64
        %v1197 = vpop.permute.xlu0 %1196
        %1198 = vrot.lane.b32.xlu0 %v1179, 64
        %v1199 = vpop.permute.xlu0 %1198
        %1200 = vrot.lane.b32.xlu0 %v1180, 64
        %v1201 = vpop.permute.xlu0 %1200
        %1202 = vrot.lane.b32.xlu0 %v1181, 64
        %v1203 = vpop.permute.xlu0 %1202
        %1204 = vrot.lane.b32.xlu0 %v1182, 64
        %v1205 = vpop.permute.xlu0 %1204
        %1206 = vrot.lane.b32.xlu0 %v1183, 64
        %v1207 = vpop.permute.xlu0 %1206
        %1216 = vst.msk [vmem:[#allocation3 + $0x8] sm:$0xff] %vm403, %v1193
        %1217 = vst.msk [vmem:[#allocation3 + $0x30] sm:$0xff] %vm403, %v1195
        %1218 = vst.msk [vmem:[#allocation3 + $0x58] sm:$0xff] %vm403, %v1197
        %1219 = vst.msk [vmem:[#allocation3 + $0x80] sm:$0xff] %vm403, %v1199
        %1220 = vst.msk [vmem:[#allocation3 + $0xa8] sm:$0xff] %vm403, %v1201
        %1221 = vst.msk [vmem:[#allocation3 + $0xd0] sm:$0xff] %vm403, %v1203
        %1222 = vst.msk [vmem:[#allocation3 + $0xf8] sm:$0xff] %vm403, %v1205
        %1223 = vst.msk [vmem:[#allocation3 + $0x120] sm:$0xff] %vm403, %v1207
        %v1224 = vld [vmem:[%s428 + $0x1] sm:$0xff]
        %v1225 = vld [vmem:[%s428 + $0x11] sm:$0xff]
        %v1226 = vld [vmem:[%s428 + $0x21] sm:$0xff]
        %v1227 = vld [vmem:[%s428 + $0x31] sm:$0xff]
        %v1228 = vld [vmem:[%s428 + $0x41] sm:$0xff]
        %v1229 = vld [vmem:[%s428 + $0x51] sm:$0xff]
        %v1230 = vld [vmem:[%s428 + $0x61] sm:$0xff]
        %v1231 = vld [vmem:[%s428 + $0x71] sm:$0xff]
        %1232 = vst.msk [vmem:[#allocation3 + $0x10] sm:$0xff] %vm354, %v1224
        %1233 = vst.msk [vmem:[#allocation3 + $0x38] sm:$0xff] %vm354, %v1225
        %1234 = vst.msk [vmem:[#allocation3 + $0x60] sm:$0xff] %vm354, %v1226
        %1235 = vst.msk [vmem:[#allocation3 + $0x88] sm:$0xff] %vm354, %v1227
        %1236 = vst.msk [vmem:[#allocation3 + $0xb0] sm:$0xff] %vm354, %v1228
        %1237 = vst.msk [vmem:[#allocation3 + $0xd8] sm:$0xff] %vm354, %v1229
        %1238 = vst.msk [vmem:[#allocation3 + $0x100] sm:$0xff] %vm354, %v1230
        %1239 = vst.msk [vmem:[#allocation3 + $0x128] sm:$0xff] %vm354, %v1231
        %v1240 = vld [vmem:[%s428 + $0x2] sm:$0xff]
        %v1241 = vld [vmem:[%s428 + $0x12] sm:$0xff]
        %v1242 = vld [vmem:[%s428 + $0x22] sm:$0xff]
        %v1243 = vld [vmem:[%s428 + $0x32] sm:$0xff]
        %v1244 = vld [vmem:[%s428 + $0x42] sm:$0xff]
        %v1245 = vld [vmem:[%s428 + $0x52] sm:$0xff]
        %v1246 = vld [vmem:[%s428 + $0x62] sm:$0xff]
        %v1247 = vld [vmem:[%s428 + $0x72] sm:$0xff]
        %1256 = vrot.lane.b32.xlu0 %v1240, 64
        %v1257 = vpop.permute.xlu0 %1256
        %1258 = vrot.lane.b32.xlu0 %v1241, 64
        %v1259 = vpop.permute.xlu0 %1258
        %1260 = vrot.lane.b32.xlu0 %v1242, 64
        %v1261 = vpop.permute.xlu0 %1260
        %1262 = vrot.lane.b32.xlu0 %v1243, 64
        %v1263 = vpop.permute.xlu0 %1262
        %1264 = vrot.lane.b32.xlu0 %v1244, 64
        %v1265 = vpop.permute.xlu0 %1264
        %1266 = vrot.lane.b32.xlu0 %v1245, 64
        %v1267 = vpop.permute.xlu0 %1266
        %1268 = vrot.lane.b32.xlu0 %v1246, 64
        %v1269 = vpop.permute.xlu0 %1268
        %1270 = vrot.lane.b32.xlu0 %v1247, 64
        %v1271 = vpop.permute.xlu0 %1270
        %1280 = vst.msk [vmem:[#allocation3 + $0x10] sm:$0xff] %vm403, %v1257
        %1281 = vst.msk [vmem:[#allocation3 + $0x38] sm:$0xff] %vm403, %v1259
        %1282 = vst.msk [vmem:[#allocation3 + $0x60] sm:$0xff] %vm403, %v1261
        %1283 = vst.msk [vmem:[#allocation3 + $0x88] sm:$0xff] %vm403, %v1263
        %1284 = vst.msk [vmem:[#allocation3 + $0xb0] sm:$0xff] %vm403, %v1265
        %1285 = vst.msk [vmem:[#allocation3 + $0xd8] sm:$0xff] %vm403, %v1267
        %1286 = vst.msk [vmem:[#allocation3 + $0x100] sm:$0xff] %vm403, %v1269
        %1287 = vst.msk [vmem:[#allocation3 + $0x128] sm:$0xff] %vm403, %v1271
        %v1288 = vld [vmem:[%s541] sm:$0xff]
        %v1289 = vld [vmem:[%s541 + $0x10] sm:$0xff]
        %v1290 = vld [vmem:[%s541 + $0x20] sm:$0xff]
        %v1291 = vld [vmem:[%s541 + $0x30] sm:$0xff]
        %v1292 = vld [vmem:[%s541 + $0x40] sm:$0xff]
        %v1293 = vld [vmem:[%s541 + $0x50] sm:$0xff]
        %v1294 = vld [vmem:[%s541 + $0x60] sm:$0xff]
        %v1295 = vld [vmem:[%s541 + $0x70] sm:$0xff]
        %1296 = vst.msk [vmem:[#allocation3 + $0x18] sm:$0xff] %vm354, %v1288
        %1297 = vst.msk [vmem:[#allocation3 + $0x40] sm:$0xff] %vm354, %v1289
        %1298 = vst.msk [vmem:[#allocation3 + $0x68] sm:$0xff] %vm354, %v1290
        %1299 = vst.msk [vmem:[#allocation3 + $0x90] sm:$0xff] %vm354, %v1291
        %1300 = vst.msk [vmem:[#allocation3 + $0xb8] sm:$0xff] %vm354, %v1292
        %1301 = vst.msk [vmem:[#allocation3 + $0xe0] sm:$0xff] %vm354, %v1293
        %1302 = vst.msk [vmem:[#allocation3 + $0x108] sm:$0xff] %vm354, %v1294
        %1303 = vst.msk [vmem:[#allocation3 + $0x130] sm:$0xff] %vm354, %v1295
        %v1304 = vld [vmem:[%s541 + $0x1] sm:$0xff]
        %v1305 = vld [vmem:[%s541 + $0x11] sm:$0xff]
        %v1306 = vld [vmem:[%s541 + $0x21] sm:$0xff]
        %v1307 = vld [vmem:[%s541 + $0x31] sm:$0xff]
        %v1308 = vld [vmem:[%s541 + $0x41] sm:$0xff]
        %v1309 = vld [vmem:[%s541 + $0x51] sm:$0xff]
        %v1310 = vld [vmem:[%s541 + $0x61] sm:$0xff]
        %v1311 = vld [vmem:[%s541 + $0x71] sm:$0xff]
        %1320 = vrot.lane.b32.xlu0 %v1304, 64
        %v1321 = vpop.permute.xlu0 %1320
        %1322 = vrot.lane.b32.xlu0 %v1305, 64
        %v1323 = vpop.permute.xlu0 %1322
        %1324 = vrot.lane.b32.xlu0 %v1306, 64
        %v1325 = vpop.permute.xlu0 %1324
        %1326 = vrot.lane.b32.xlu0 %v1307, 64
        %v1327 = vpop.permute.xlu0 %1326
        %1328 = vrot.lane.b32.xlu0 %v1308, 64
        %v1329 = vpop.permute.xlu0 %1328
        %1330 = vrot.lane.b32.xlu0 %v1309, 64
        %v1331 = vpop.permute.xlu0 %1330
        %1332 = vrot.lane.b32.xlu0 %v1310, 64
        %v1333 = vpop.permute.xlu0 %1332
        %1334 = vrot.lane.b32.xlu0 %v1311, 64
        %v1335 = vpop.permute.xlu0 %1334
        %1344 = vst.msk [vmem:[#allocation3 + $0x18] sm:$0xff] %vm403, %v1321
        %1345 = vst.msk [vmem:[#allocation3 + $0x40] sm:$0xff] %vm403, %v1323
        %1346 = vst.msk [vmem:[#allocation3 + $0x68] sm:$0xff] %vm403, %v1325
        %1347 = vst.msk [vmem:[#allocation3 + $0x90] sm:$0xff] %vm403, %v1327
        %1348 = vst.msk [vmem:[#allocation3 + $0xb8] sm:$0xff] %vm403, %v1329
        %1349 = vst.msk [vmem:[#allocation3 + $0xe0] sm:$0xff] %vm403, %v1331
        %1350 = vst.msk [vmem:[#allocation3 + $0x108] sm:$0xff] %vm403, %v1333
        %1351 = vst.msk [vmem:[#allocation3 + $0x130] sm:$0xff] %vm403, %v1335
        %v1352 = vld [vmem:[%s541 + $0x2] sm:$0xff]
        %v1353 = vld [vmem:[%s541 + $0x12] sm:$0xff]
        %v1354 = vld [vmem:[%s541 + $0x22] sm:$0xff]
        %v1355 = vld [vmem:[%s541 + $0x32] sm:$0xff]
        %v1356 = vld [vmem:[%s541 + $0x42] sm:$0xff]
        %v1357 = vld [vmem:[%s541 + $0x52] sm:$0xff]
        %v1358 = vld [vmem:[%s541 + $0x62] sm:$0xff]
        %v1359 = vld [vmem:[%s541 + $0x72] sm:$0xff]
        %1360 = vst.msk [vmem:[#allocation3 + $0x20] sm:$0xff] %vm354, %v1352
        %1361 = vst.msk [vmem:[#allocation3 + $0x48] sm:$0xff] %vm354, %v1353
        %1362 = vst.msk [vmem:[#allocation3 + $0x70] sm:$0xff] %vm354, %v1354
        %1363 = vst.msk [vmem:[#allocation3 + $0x98] sm:$0xff] %vm354, %v1355
        %1364 = vst.msk [vmem:[#allocation3 + $0xc0] sm:$0xff] %vm354, %v1356
        %1365 = vst.msk [vmem:[#allocation3 + $0xe8] sm:$0xff] %vm354, %v1357
        %1366 = vst.msk [vmem:[#allocation3 + $0x110] sm:$0xff] %vm354, %v1358
        %1367 = vst.msk [vmem:[#allocation3 + $0x138] sm:$0xff] %vm354, %v1359
        %v1368 = vld [vmem:[#allocation3] sm:$0xff]
        %v1369 = vld [vmem:[#allocation3 + $0x8] sm:$0xff]
        %v1370 = vld [vmem:[#allocation3 + $0x10] sm:$0xff]
        %v1371 = vld [vmem:[#allocation3 + $0x18] sm:$0xff]
        %v1372 = vld [vmem:[#allocation3 + $0x20] sm:$0xff]
        %v1373 = vld [vmem:[#allocation3 + $0x28] sm:$0xff]
        %v1374 = vld [vmem:[#allocation3 + $0x30] sm:$0xff]
        %v1375 = vld [vmem:[#allocation3 + $0x38] sm:$0xff]
        %v1376 = vld [vmem:[#allocation3 + $0x40] sm:$0xff]
        %v1377 = vld [vmem:[#allocation3 + $0x48] sm:$0xff]
        %v1378 = vld [vmem:[#allocation3 + $0x50] sm:$0xff]
        %v1379 = vld [vmem:[#allocation3 + $0x58] sm:$0xff]
        %v1380 = vld [vmem:[#allocation3 + $0x60] sm:$0xff]
        %v1381 = vld [vmem:[#allocation3 + $0x68] sm:$0xff]
        %v1382 = vld [vmem:[#allocation3 + $0x70] sm:$0xff]
        %v1383 = vld [vmem:[#allocation3 + $0x78] sm:$0xff]
        %v1384 = vld [vmem:[#allocation3 + $0x80] sm:$0xff]
        %v1385 = vld [vmem:[#allocation3 + $0x88] sm:$0xff]
        %v1386 = vld [vmem:[#allocation3 + $0x90] sm:$0xff]
        %v1387 = vld [vmem:[#allocation3 + $0x98] sm:$0xff]
        %v1388 = vld [vmem:[#allocation3 + $0xa0] sm:$0xff]
        %v1389 = vld [vmem:[#allocation3 + $0xa8] sm:$0xff]
        %v1390 = vld [vmem:[#allocation3 + $0xb0] sm:$0xff]
        %v1391 = vld [vmem:[#allocation3 + $0xb8] sm:$0xff]
        %v1392 = vld [vmem:[#allocation3 + $0xc0] sm:$0xff]
        %v1393 = vld [vmem:[#allocation3 + $0xc8] sm:$0xff]
        %v1394 = vld [vmem:[#allocation3 + $0xd0] sm:$0xff]
        %v1395 = vld [vmem:[#allocation3 + $0xd8] sm:$0xff]
        %v1396 = vld [vmem:[#allocation3 + $0xe0] sm:$0xff]
        %v1397 = vld [vmem:[#allocation3 + $0xe8] sm:$0xff]
        %v1398 = vld [vmem:[#allocation3 + $0xf0] sm:$0xff]
        %v1399 = vld [vmem:[#allocation3 + $0xf8] sm:$0xff]
        %v1400 = vld [vmem:[#allocation3 + $0x100] sm:$0xff]
        %v1401 = vld [vmem:[#allocation3 + $0x108] sm:$0xff]
        %v1402 = vld [vmem:[#allocation3 + $0x110] sm:$0xff]
        %v1403 = vld [vmem:[#allocation3 + $0x118] sm:$0xff]
        %v1404 = vld [vmem:[#allocation3 + $0x120] sm:$0xff]
        %v1405 = vld [vmem:[#allocation3 + $0x128] sm:$0xff]
        %v1406 = vld [vmem:[#allocation3 + $0x130] sm:$0xff]
        %v1407 = vld [vmem:[#allocation3 + $0x138] sm:$0xff]
        %v1408 = vld [vmem:[%s299] sm:$0xff]
        %v1409 = vld [vmem:[%s299 + $0x8] sm:$0xff]
        %v1410 = vld [vmem:[%s299 + $0x10] sm:$0xff]
        %v1411 = vld [vmem:[%s299 + $0x18] sm:$0xff]
        %v1412 = vld [vmem:[%s299 + $0x20] sm:$0xff]
        %v1413 = vld [vmem:[%s299 + $0x28] sm:$0xff]
        %v1414 = vld [vmem:[%s299 + $0x30] sm:$0xff]
        %v1415 = vld [vmem:[%s299 + $0x38] sm:$0xff]
        %v1416 = vld [vmem:[%s299 + $0x40] sm:$0xff]
        %v1417 = vld [vmem:[%s299 + $0x48] sm:$0xff]
        %v1418 = vld [vmem:[%s299 + $0x50] sm:$0xff]
        %v1419 = vld [vmem:[%s299 + $0x58] sm:$0xff]
        %v1420 = vld [vmem:[%s299 + $0x60] sm:$0xff]
        %v1421 = vld [vmem:[%s299 + $0x68] sm:$0xff]
        %v1422 = vld [vmem:[%s299 + $0x70] sm:$0xff]
        %v1423 = vld [vmem:[%s299 + $0x78] sm:$0xff]
        %v1424 = vld [vmem:[%s299 + $0x80] sm:$0xff]
        %v1425 = vld [vmem:[%s299 + $0x88] sm:$0xff]
        %v1426 = vld [vmem:[%s299 + $0x90] sm:$0xff]
        %v1427 = vld [vmem:[%s299 + $0x98] sm:$0xff]
        %v1428 = vld [vmem:[%s299 + $0xa0] sm:$0xff]
        %v1429 = vld [vmem:[%s299 + $0xa8] sm:$0xff]
        %v1430 = vld [vmem:[%s299 + $0xb0] sm:$0xff]
        %v1431 = vld [vmem:[%s299 + $0xb8] sm:$0xff]
        %v1432 = vld [vmem:[%s299 + $0xc0] sm:$0xff]
        %v1433 = vld [vmem:[%s299 + $0xc8] sm:$0xff]
        %v1434 = vld [vmem:[%s299 + $0xd0] sm:$0xff]
        %v1435 = vld [vmem:[%s299 + $0xd8] sm:$0xff]
        %v1436 = vld [vmem:[%s299 + $0xe0] sm:$0xff]
        %v1437 = vld [vmem:[%s299 + $0xe8] sm:$0xff]
        %v1438 = vld [vmem:[%s299 + $0xf0] sm:$0xff]
        %v1439 = vld [vmem:[%s299 + $0xf8] sm:$0xff]
        %v1440 = vld [vmem:[%s299 + $0x100] sm:$0xff]
        %v1441 = vld [vmem:[%s299 + $0x108] sm:$0xff]
        %v1442 = vld [vmem:[%s299 + $0x110] sm:$0xff]
        %v1443 = vld [vmem:[%s299 + $0x118] sm:$0xff]
        %v1444 = vld [vmem:[%s299 + $0x120] sm:$0xff]
        %v1445 = vld [vmem:[%s299 + $0x128] sm:$0xff]
        %v1446 = vld [vmem:[%s299 + $0x130] sm:$0xff]
        %v1447 = vld [vmem:[%s299 + $0x138] sm:$0xff]
        %v1448 = vld [vmem:[%s299 + $0x140] sm:$0xff]
        %v1449 = vld [vmem:[%s299 + $0x148] sm:$0xff]
        %v1450 = vld [vmem:[%s299 + $0x150] sm:$0xff]
        %v1451 = vld [vmem:[%s299 + $0x158] sm:$0xff]
        %v1452 = vld [vmem:[%s299 + $0x160] sm:$0xff]
        %v1453 = vld [vmem:[%s299 + $0x168] sm:$0xff]
        %v1454 = vld [vmem:[%s299 + $0x170] sm:$0xff]
        %v1455 = vld [vmem:[%s299 + $0x178] sm:$0xff]
        %v1456 = vld [vmem:[%s299 + $0x180] sm:$0xff]
        %v1457 = vld [vmem:[%s299 + $0x188] sm:$0xff]
        %v1458 = vld [vmem:[%s299 + $0x190] sm:$0xff]
        %v1459 = vld [vmem:[%s299 + $0x198] sm:$0xff]
        %v1460 = vld [vmem:[%s299 + $0x1a0] sm:$0xff]
        %v1461 = vld [vmem:[%s299 + $0x1a8] sm:$0xff]
        %v1462 = vld [vmem:[%s299 + $0x1b0] sm:$0xff]
        %v1463 = vld [vmem:[%s299 + $0x1b8] sm:$0xff]
        %v1464 = vld [vmem:[%s299 + $0x1c0] sm:$0xff]
        %v1465 = vld [vmem:[%s299 + $0x1c8] sm:$0xff]
        %v1466 = vld [vmem:[%s299 + $0x1d0] sm:$0xff]
        %v1467 = vld [vmem:[%s299 + $0x1d8] sm:$0xff]
        %v1468 = vld [vmem:[%s299 + $0x1e0] sm:$0xff]
        %v1469 = vld [vmem:[%s299 + $0x1e8] sm:$0xff]
        %v1470 = vld [vmem:[%s299 + $0x1f0] sm:$0xff]
        %v1471 = vld [vmem:[%s299 + $0x1f8] sm:$0xff]
        %v1472 = vld [vmem:[%s299 + $0x200] sm:$0xff]
        %v1473 = vld [vmem:[%s299 + $0x208] sm:$0xff]
        %v1474 = vld [vmem:[%s299 + $0x210] sm:$0xff]
        %v1475 = vld [vmem:[%s299 + $0x218] sm:$0xff]
        %v1476 = vld [vmem:[%s299 + $0x220] sm:$0xff]
        %v1477 = vld [vmem:[%s299 + $0x228] sm:$0xff]
        %v1478 = vld [vmem:[%s299 + $0x230] sm:$0xff]
        %v1479 = vld [vmem:[%s299 + $0x238] sm:$0xff]
        %v1480 = vld [vmem:[%s302] sm:$0x1]
        %v1482 = vlaneseq
        %v1483 = vshrl.u32 %v1482, 7
        %v1484 = vsub.s32 0, %v1483
        %v1485 = vrot.slane %v1480, %v1484
        %v1488 = vsel %vm354, %v1372, 0
        %v1491 = vsel %vm354, %v1377, 0
        %v1494 = vsel %vm354, %v1382, 0
        %v1497 = vsel %vm354, %v1387, 0
        %v1500 = vsel %vm354, %v1392, 0
        %v1503 = vsel %vm354, %v1397, 0
        %v1506 = vsel %vm354, %v1402, 0
        %v1509 = vsel %vm354, %v1407, 0
        %1511 = vmatprep.subr.mxu0 0.0
        %1512 = vmatpush1.msra.mxu0 %v1408
        %1513 = vmatprep.subr.mxu0 0.0
        %1514 = vmatpush1.msra.mxu0 %v1409
        %1515 = vmatprep.subr.mxu0 0.0
        %1516 = vmatpush1.msra.mxu0 %v1410
        %1517 = vmatprep.subr.mxu0 0.0
        %1518 = vmatpush1.msra.mxu0 %v1411
        %1519 = vmatprep.subr.mxu0 0.0
        %1520 = vmatpush1.msra.mxu0 %v1412
        %1521 = vmatprep.subr.mxu0 0.0
        %1522 = vmatpush1.msra.mxu0 %v1413
        %1523 = vmatprep.subr.mxu0 0.0
        %1524 = vmatpush1.msra.mxu0 %v1414
        %1525 = vmatprep.subr.mxu0 0.0
        %1526 = vmatpush1.msra.mxu0 %v1415
        %1527 = vmatprep.subr.mxu0 0.0
        %1528 = vmatpush1.msra.mxu0 %v1416
        %1529 = vmatprep.subr.mxu0 0.0
        %1530 = vmatpush1.msra.mxu0 %v1417
        %1531 = vmatprep.subr.mxu0 0.0
        %1532 = vmatpush1.msra.mxu0 %v1418
        %1533 = vmatprep.subr.mxu0 0.0
        %1534 = vmatpush1.msra.mxu0 %v1419
        %1535 = vmatprep.subr.mxu0 0.0
        %1536 = vmatpush1.msra.mxu0 %v1420
        %1537 = vmatprep.subr.mxu0 0.0
        %1538 = vmatpush1.msra.mxu0 %v1421
        %1539 = vmatprep.subr.mxu0 0.0
        %1540 = vmatpush1.msra.mxu0 %v1422
        %1541 = vmatprep.subr.mxu0 0.0
        %1542 = vmatpush1.msra.mxu0 %v1423
        %1543 = vmatprep.subr.mxu0 0.0
        %1544 = vmatpush1.msra.mxu0 %v1424
        %1545 = vmatprep.subr.mxu0 0.0
        %1546 = vmatpush1.msra.mxu0 %v1425
        %1547 = vmatprep.subr.mxu0 0.0
        %1548 = vmatpush1.msra.mxu0 %v1426
        %1549 = vmatprep.subr.mxu0 0.0
        %1550 = vmatpush1.msra.mxu0 %v1427
        %1551 = vmatprep.subr.mxu0 0.0
        %1552 = vmatpush1.msra.mxu0 %v1428
        %1553 = vmatprep.subr.mxu0 0.0
        %1554 = vmatpush1.msra.mxu0 %v1429
        %1555 = vmatprep.subr.mxu0 0.0
        %1556 = vmatpush1.msra.mxu0 %v1430
        %1557 = vmatprep.subr.mxu0 0.0
        %1558 = vmatpush1.msra.mxu0 %v1431
        %1559 = vmatprep.subr.mxu0 0.0
        %1560 = vmatpush1.msra.mxu0 %v1432
        %1561 = vmatprep.subr.mxu0 0.0
        %1562 = vmatpush1.msra.mxu0 %v1433
        %1563 = vmatprep.subr.mxu0 0.0
        %1564 = vmatpush1.msra.mxu0 %v1434
        %1565 = vmatprep.subr.mxu0 0.0
        %1566 = vmatpush1.msra.mxu0 %v1435
        %1567 = vmatprep.subr.mxu0 0.0
        %1568 = vmatpush1.msra.mxu0 %v1436
        %1569 = vmatprep.subr.mxu0 0.0
        %1570 = vmatpush1.msra.mxu0 %v1437
        %1571 = vmatprep.subr.mxu0 0.0
        %1572 = vmatpush1.msra.mxu0 %v1438
        %1573 = vmatprep.subr.mxu0 0.0
        %1574 = vmatpush1.msra.mxu0 %v1439
        %1575 = vmatprep.mubr.f32.mxu0 %v1369
        %1576 = vmatmul.mubr.f32.gmra.mrb[0].mxu0 %v1368
        %v1577 = vpop.f32.mrb[0].mxu0
        %v1578 = vadd.f32 %v1485, %v1577
        %v1579 = vpop.f32.mrb[0].mxu0
        %1580 = vmatprep.mubr.f32.mxu0 %v1374
        %1581 = vmatmul.mubr.f32.gmra.mrb[0].mxu0 %v1373
        %v1582 = vpop.f32.mrb[0].mxu0
        %v1583 = vadd.f32 %v1485, %v1582
        %v1584 = vpop.f32.mrb[0].mxu0
        %1585 = vmatprep.mubr.f32.mxu0 %v1379
        %1586 = vmatmul.mubr.f32.gmra.mrb[0].mxu0 %v1378
        %v1587 = vpop.f32.mrb[0].mxu0
        %v1588 = vadd.f32 %v1485, %v1587
        %v1589 = vpop.f32.mrb[0].mxu0
        %1590 = vmatprep.mubr.f32.mxu0 %v1384
        %1591 = vmatmul.mubr.f32.gmra.mrb[0].mxu0 %v1383
        %v1592 = vpop.f32.mrb[0].mxu0
        %v1593 = vadd.f32 %v1485, %v1592
        %v1594 = vpop.f32.mrb[0].mxu0
        %1595 = vmatprep.mubr.f32.mxu0 %v1389
        %1596 = vmatmul.mubr.f32.gmra.mrb[0].mxu0 %v1388
        %v1597 = vpop.f32.mrb[0].mxu0
        %v1598 = vadd.f32 %v1485, %v1597
        %v1599 = vpop.f32.mrb[0].mxu0
        %1600 = vmatprep.mubr.f32.mxu0 %v1394
        %1601 = vmatmul.mubr.f32.gmra.mrb[0].mxu0 %v1393
        %v1602 = vpop.f32.mrb[0].mxu0
        %v1603 = vadd.f32 %v1485, %v1602
        %v1604 = vpop.f32.mrb[0].mxu0
        %1605 = vmatprep.mubr.f32.mxu0 %v1399
        %1606 = vmatmul.mubr.f32.gmra.mrb[0].mxu0 %v1398
        %v1607 = vpop.f32.mrb[0].mxu0
        %v1608 = vadd.f32 %v1485, %v1607
        %v1609 = vpop.f32.mrb[0].mxu0
        %1610 = vmatprep.mubr.f32.mxu0 %v1404
        %1611 = vmatmul.mubr.f32.gmra.mrb[0].mxu0 %v1403
        %v1612 = vpop.f32.mrb[0].mxu0
        %v1613 = vadd.f32 %v1485, %v1612
        %v1614 = vpop.f32.mrb[0].mxu0
        %1615 = vdwg.mxu0
        %1616 = vmatprep.subr.mxu0 0.0
        %1617 = vmatpush1.msra.mxu0 %v1440
        %1618 = vmatprep.subr.mxu0 0.0
        %1619 = vmatpush1.msra.mxu0 %v1441
        %1620 = vmatprep.subr.mxu0 0.0
        %1621 = vmatpush1.msra.mxu0 %v1442
        %1622 = vmatprep.subr.mxu0 0.0
        %1623 = vmatpush1.msra.mxu0 %v1443
        %1624 = vmatprep.subr.mxu0 0.0
        %1625 = vmatpush1.msra.mxu0 %v1444
        %1626 = vmatprep.subr.mxu0 0.0
        %1627 = vmatpush1.msra.mxu0 %v1445
        %1628 = vmatprep.subr.mxu0 0.0
        %1629 = vmatpush1.msra.mxu0 %v1446
        %1630 = vmatprep.subr.mxu0 0.0
        %1631 = vmatpush1.msra.mxu0 %v1447
        %1632 = vmatprep.subr.mxu0 0.0
        %1633 = vmatpush1.msra.mxu0 %v1448
        %1634 = vmatprep.subr.mxu0 0.0
        %1635 = vmatpush1.msra.mxu0 %v1449
        %1636 = vmatprep.subr.mxu0 0.0
        %1637 = vmatpush1.msra.mxu0 %v1450
        %1638 = vmatprep.subr.mxu0 0.0
        %1639 = vmatpush1.msra.mxu0 %v1451
        %1640 = vmatprep.subr.mxu0 0.0
        %1641 = vmatpush1.msra.mxu0 %v1452
        %1642 = vmatprep.subr.mxu0 0.0
        %1643 = vmatpush1.msra.mxu0 %v1453
        %1644 = vmatprep.subr.mxu0 0.0
        %1645 = vmatpush1.msra.mxu0 %v1454
        %1646 = vmatprep.subr.mxu0 0.0
        %1647 = vmatpush1.msra.mxu0 %v1455
        %1648 = vmatprep.subr.mxu0 0.0
        %1649 = vmatpush1.msra.mxu0 %v1456
        %1650 = vmatprep.subr.mxu0 0.0
        %1651 = vmatpush1.msra.mxu0 %v1457
        %1652 = vmatprep.subr.mxu0 0.0
        %1653 = vmatpush1.msra.mxu0 %v1458
        %1654 = vmatprep.subr.mxu0 0.0
        %1655 = vmatpush1.msra.mxu0 %v1459
        %1656 = vmatprep.subr.mxu0 0.0
        %1657 = vmatpush1.msra.mxu0 %v1460
        %1658 = vmatprep.subr.mxu0 0.0
        %1659 = vmatpush1.msra.mxu0 %v1461
        %1660 = vmatprep.subr.mxu0 0.0
        %1661 = vmatpush1.msra.mxu0 %v1462
        %1662 = vmatprep.subr.mxu0 0.0
        %1663 = vmatpush1.msra.mxu0 %v1463
        %1664 = vmatprep.subr.mxu0 0.0
        %1665 = vmatpush1.msra.mxu0 %v1464
        %1666 = vmatprep.subr.mxu0 0.0
        %1667 = vmatpush1.msra.mxu0 %v1465
        %1668 = vmatprep.subr.mxu0 0.0
        %1669 = vmatpush1.msra.mxu0 %v1466
        %1670 = vmatprep.subr.mxu0 0.0
        %1671 = vmatpush1.msra.mxu0 %v1467
        %1672 = vmatprep.subr.mxu0 0.0
        %1673 = vmatpush1.msra.mxu0 %v1468
        %1674 = vmatprep.subr.mxu0 0.0
        %1675 = vmatpush1.msra.mxu0 %v1469
        %1676 = vmatprep.subr.mxu0 0.0
        %1677 = vmatpush1.msra.mxu0 %v1470
        %1678 = vmatprep.subr.mxu0 0.0
        %1679 = vmatpush1.msra.mxu0 %v1471
        %1680 = vmatprep.mubr.f32.mxu0 %v1371
        %1681 = vmatmul.mubr.f32.gmra.mrb[0].mxu0 %v1370
        %v1682 = vpop.f32.mrb[0].mxu0
        %v1683 = vadd.f32 %v1578, %v1682
        %v1684 = vpop.f32.mrb[0].mxu0
        %1685 = vmatprep.mubr.f32.mxu0 %v1376
        %1686 = vmatmul.mubr.f32.gmra.mrb[0].mxu0 %v1375
        %v1687 = vpop.f32.mrb[0].mxu0
        %v1688 = vadd.f32 %v1583, %v1687
        %v1689 = vpop.f32.mrb[0].mxu0
        %1690 = vmatprep.mubr.f32.mxu0 %v1381
        %1691 = vmatmul.mubr.f32.gmra.mrb[0].mxu0 %v1380
        %v1692 = vpop.f32.mrb[0].mxu0
        %v1693 = vadd.f32 %v1588, %v1692
        %v1694 = vpop.f32.mrb[0].mxu0
        %1695 = vmatprep.mubr.f32.mxu0 %v1386
        %1696 = vmatmul.mubr.f32.gmra.mrb[0].mxu0 %v1385
        %v1697 = vpop.f32.mrb[0].mxu0
        %v1698 = vadd.f32 %v1593, %v1697
        %v1699 = vpop.f32.mrb[0].mxu0
        %1700 = vmatprep.mubr.f32.mxu0 %v1391
        %1701 = vmatmul.mubr.f32.gmra.mrb[0].mxu0 %v1390
        %v1702 = vpop.f32.mrb[0].mxu0
        %v1703 = vadd.f32 %v1598, %v1702
        %v1704 = vpop.f32.mrb[0].mxu0
        %1705 = vmatprep.mubr.f32.mxu0 %v1396
        %1706 = vmatmul.mubr.f32.gmra.mrb[0].mxu0 %v1395
        %v1707 = vpop.f32.mrb[0].mxu0
        %v1708 = vadd.f32 %v1603, %v1707
        %v1709 = vpop.f32.mrb[0].mxu0
        %1710 = vmatprep.mubr.f32.mxu0 %v1401
        %1711 = vmatmul.mubr.f32.gmra.mrb[0].mxu0 %v1400
        %v1712 = vpop.f32.mrb[0].mxu0
        %v1713 = vadd.f32 %v1608, %v1712
        %v1714 = vpop.f32.mrb[0].mxu0
        %1715 = vmatprep.mubr.f32.mxu0 %v1406
        %1716 = vmatmul.mubr.f32.gmra.mrb[0].mxu0 %v1405
        %v1717 = vpop.f32.mrb[0].mxu0
        %v1718 = vadd.f32 %v1613, %v1717
        %v1719 = vpop.f32.mrb[0].mxu0
        %1720 = vdwg.mxu0
        %1721 = vmatprep.subr.mxu0 0.0
        %1722 = vmatpush1.msra.mxu0 %v1472
        %1723 = vmatprep.subr.mxu0 0.0
        %1724 = vmatpush1.msra.mxu0 %v1473
        %1725 = vmatprep.subr.mxu0 0.0
        %1726 = vmatpush1.msra.mxu0 %v1474
        %1727 = vmatprep.subr.mxu0 0.0
        %1728 = vmatpush1.msra.mxu0 %v1475
        %1729 = vmatprep.subr.mxu0 0.0
        %1730 = vmatpush1.msra.mxu0 %v1476
        %1731 = vmatprep.subr.mxu0 0.0
        %1732 = vmatpush1.msra.mxu0 %v1477
        %1733 = vmatprep.subr.mxu0 0.0
        %1734 = vmatpush1.msra.mxu0 %v1478
        %1735 = vmatprep.subr.mxu0 0.0
        %1736 = vmatpush1.msra.mxu0 %v1479
        %1737 = vmatprep.subr.mxu0 0.0
        %1738 = vmatpush1.msra.mxu0 0.0
        %1739 = vmatprep.subr.mxu0 0.0
        %1740 = vmatpush1.msra.mxu0 0.0
        %1741 = vmatprep.subr.mxu0 0.0
        %1742 = vmatpush1.msra.mxu0 0.0
        %1743 = vmatprep.subr.mxu0 0.0
        %1744 = vmatpush1.msra.mxu0 0.0
        %1745 = vmatprep.subr.mxu0 0.0
        %1746 = vmatpush1.msra.mxu0 0.0
        %1747 = vmatprep.subr.mxu0 0.0
        %1748 = vmatpush1.msra.mxu0 0.0
        %1749 = vmatprep.subr.mxu0 0.0
        %1750 = vmatpush1.msra.mxu0 0.0
        %1751 = vmatprep.subr.mxu0 0.0
        %1752 = vmatpush1.msra.mxu0 0.0
        %1753 = vmatprep.subr.mxu0 0.0
        %1754 = vmatpush1.msra.mxu0 0.0
        %1755 = vmatprep.subr.mxu0 0.0
        %1756 = vmatpush1.msra.mxu0 0.0
        %1757 = vmatprep.subr.mxu0 0.0
        %1758 = vmatpush1.msra.mxu0 0.0
        %1759 = vmatprep.subr.mxu0 0.0
        %1760 = vmatpush1.msra.mxu0 0.0
        %1761 = vmatprep.subr.mxu0 0.0
        %1762 = vmatpush1.msra.mxu0 0.0
        %1763 = vmatprep.subr.mxu0 0.0
        %1764 = vmatpush1.msra.mxu0 0.0
        %1765 = vmatprep.subr.mxu0 0.0
        %1766 = vmatpush1.msra.mxu0 0.0
        %1767 = vmatprep.subr.mxu0 0.0
        %1768 = vmatpush1.msra.mxu0 0.0
        %1769 = vmatprep.subr.mxu0 0.0
        %1770 = vmatpush1.msra.mxu0 0.0
        %1771 = vmatprep.subr.mxu0 0.0
        %1772 = vmatpush1.msra.mxu0 0.0
        %1773 = vmatprep.subr.mxu0 0.0
        %1774 = vmatpush1.msra.mxu0 0.0
        %1775 = vmatprep.subr.mxu0 0.0
        %1776 = vmatpush1.msra.mxu0 0.0
        %1777 = vmatprep.subr.mxu0 0.0
        %1778 = vmatpush1.msra.mxu0 0.0
        %1779 = vmatprep.subr.mxu0 0.0
        %1780 = vmatpush1.msra.mxu0 0.0
        %1781 = vmatprep.subr.mxu0 0.0
        %1782 = vmatpush1.msra.mxu0 0.0
        %1783 = vmatprep.subr.mxu0 0.0
        %1784 = vmatpush1.msra.mxu0 0.0
        %1785 = vmatprep.mubr.f32.mxu0 0.0
        %1786 = vmatmul.mubr.f32.gmra.mrb[0].mxu0 %v1488
        %v1787 = vpop.f32.mrb[0].mxu0
        %v1788 = vadd.f32 %v1683, %v1787
        %v1789 = vpop.f32.mrb[0].mxu0
        %1790 = vmatprep.mubr.f32.mxu0 0.0
        %1791 = vmatmul.mubr.f32.gmra.mrb[0].mxu0 %v1491
        %v1792 = vpop.f32.mrb[0].mxu0
        %v1793 = vadd.f32 %v1688, %v1792
        %v1794 = vpop.f32.mrb[0].mxu0
        %1795 = vmatprep.mubr.f32.mxu0 0.0
        %1796 = vmatmul.mubr.f32.gmra.mrb[0].mxu0 %v1494
        %v1797 = vpop.f32.mrb[0].mxu0
        %v1798 = vadd.f32 %v1693, %v1797
        %v1799 = vpop.f32.mrb[0].mxu0
        %1800 = vmatprep.mubr.f32.mxu0 0.0
        %1801 = vmatmul.mubr.f32.gmra.mrb[0].mxu0 %v1497
        %v1802 = vpop.f32.mrb[0].mxu0
        %v1803 = vadd.f32 %v1698, %v1802
        %v1804 = vpop.f32.mrb[0].mxu0
        %1805 = vmatprep.mubr.f32.mxu0 0.0
        %1806 = vmatmul.mubr.f32.gmra.mrb[0].mxu0 %v1500
        %v1807 = vpop.f32.mrb[0].mxu0
        %v1808 = vadd.f32 %v1703, %v1807
        %v1809 = vpop.f32.mrb[0].mxu0
        %1810 = vmatprep.mubr.f32.mxu0 0.0
        %1811 = vmatmul.mubr.f32.gmra.mrb[0].mxu0 %v1503
        %v1812 = vpop.f32.mrb[0].mxu0
        %v1813 = vadd.f32 %v1708, %v1812
        %v1814 = vpop.f32.mrb[0].mxu0
        %1815 = vmatprep.mubr.f32.mxu0 0.0
        %1816 = vmatmul.mubr.f32.gmra.mrb[0].mxu0 %v1506
        %v1817 = vpop.f32.mrb[0].mxu0
        %v1818 = vadd.f32 %v1713, %v1817
        %v1819 = vpop.f32.mrb[0].mxu0
        %1820 = vmatprep.mubr.f32.mxu0 0.0
        %1821 = vmatmul.mubr.f32.gmra.mrb[0].mxu0 %v1509
        %v1822 = vpop.f32.mrb[0].mxu0
        %v1823 = vadd.f32 %v1718, %v1822
        %v1824 = vpop.f32.mrb[0].mxu0
        %1825 = vdwg.mxu0
        %v1826 = vmax.f32 %v1788, 0.0
        %v1827 = vmax.f32 %v1793, 0.0
        %v1828 = vmax.f32 %v1798, 0.0
        %v1829 = vmax.f32 %v1803, 0.0
        %v1830 = vmax.f32 %v1808, 0.0
        %v1831 = vmax.f32 %v1813, 0.0
        %v1832 = vmax.f32 %v1818, 0.0
        %v1833 = vmax.f32 %v1823, 0.0
        %v1834 = vld [vmem:[%s286] sm:$0xff]
        %v1835 = vld [vmem:[%s286 + $0x8] sm:$0xff]
        %v1836 = vld [vmem:[%s286 + $0x10] sm:$0xff]
        %v1837 = vld [vmem:[%s286 + $0x18] sm:$0xff]
        %v1838 = vld [vmem:[%s286 + $0x20] sm:$0xff]
        %v1839 = vld [vmem:[%s286 + $0x28] sm:$0xff]
        %v1840 = vld [vmem:[%s286 + $0x30] sm:$0xff]
        %v1841 = vld [vmem:[%s286 + $0x38] sm:$0xff]
        %v1842 = vadd.f32 %v1826, %v1834
        %v1843 = vadd.f32 %v1827, %v1835
        %v1844 = vadd.f32 %v1828, %v1836
        %v1845 = vadd.f32 %v1829, %v1837
        %v1846 = vadd.f32 %v1830, %v1838
        %v1847 = vadd.f32 %v1831, %v1839
        %v1848 = vadd.f32 %v1832, %v1840
        %v1849 = vadd.f32 %v1833, %v1841
        %v1850 = vmax.f32 %v1842, 0.0
        %v1851 = vmax.f32 %v1843, 0.0
        %v1852 = vmax.f32 %v1844, 0.0
        %v1853 = vmax.f32 %v1845, 0.0
        %v1854 = vmax.f32 %v1846, 0.0
        %v1855 = vmax.f32 %v1847, 0.0
        %v1856 = vmax.f32 %v1848, 0.0
        %v1857 = vmax.f32 %v1849, 0.0
        %1858 = vst.msk [vmem:[%s428 + $0x1] sm:$0xff] %vm354, %v1850
        %1859 = vst.msk [vmem:[%s428 + $0x11] sm:$0xff] %vm354, %v1851
        %1860 = vst.msk [vmem:[%s428 + $0x21] sm:$0xff] %vm354, %v1852
        %1861 = vst.msk [vmem:[%s428 + $0x31] sm:$0xff] %vm354, %v1853
        %1862 = vst.msk [vmem:[%s428 + $0x41] sm:$0xff] %vm354, %v1854
        %1863 = vst.msk [vmem:[%s428 + $0x51] sm:$0xff] %vm354, %v1855
        %1864 = vst.msk [vmem:[%s428 + $0x61] sm:$0xff] %vm354, %v1856
        %1865 = vst.msk [vmem:[%s428 + $0x71] sm:$0xff] %vm354, %v1857
        %p1866 = scmp.eq.s32.totalorder %s24, 8
        // Predicated region
        $region45: #{residual_block_forward.1} parent=39 // pred_check
          %p1867 = pneg %p1866
        $region46: #{residual_block_forward.1} parent=39 // pred_check_branch
          %1869 = sbr.rel (%p1867) target = $region48
        $region47: #{residual_block_forward.1} parent=39 // pred_region
          %1870 = vst.msk [vmem:[%s281] sm:$0xff] %vm354, %v1850
          %1871 = vst.msk [vmem:[%s281 + $0x8] sm:$0xff] %vm354, %v1851
          %1872 = vst.msk [vmem:[%s281 + $0x10] sm:$0xff] %vm354, %v1852
          %1873 = vst.msk [vmem:[%s281 + $0x18] sm:$0xff] %vm354, %v1853
          %1874 = vst.msk [vmem:[%s281 + $0x20] sm:$0xff] %vm354, %v1854
          %1875 = vst.msk [vmem:[%s281 + $0x28] sm:$0xff] %vm354, %v1855
          %1876 = vst.msk [vmem:[%s281 + $0x30] sm:$0xff] %vm354, %v1856
          %1877 = vst.msk [vmem:[%s281 + $0x38] sm:$0xff] %vm354, %v1857
        $region48: #{residual_block_forward.1} parent=39 // pred_fallthru
          _
        %s1878 = sand.u32 %s169, 1
        %s1879 = scalar_lea.sflag [#allocation5], %s1878
        %s1880 = sand.u32 %s169, 1
        %s1881 = smul.addr %s1880, 64
        %s1882 = scalar_lea.vmem [#allocation4], %s1881
        // Predicated region
        $region49: #{residual_block_forward.1} parent=39 // pred_check
          %p1883 = pneg %p179
        $region50: #{residual_block_forward.1} parent=39 // pred_check_branch
          %1885 = sbr.rel (%p1883) target = $region52
        $region51: #{residual_block_forward.1} parent=39 // pred_region
          %s1887 = ssub.s32 1024, 1024
          %1888 = vsyncadd %s1879, %s1887
          %s1889 = smul.addr %s23, 8
          %s1890 = smul.addr %s1889, 128
          %s1891 = scalar_lea.hbm %s5, %s1890
          %s1892 = sshll.u32 %s1882, 4
          %s1893 = int_to_ptr.vmem [resolvable:$true] %s1892
          %1898 = dma.vmem_to_hbm [thread:$0]  %s1893, 1024, %s1891, %s1879, 128, 128, 8
        $region52: #{residual_block_forward.1} parent=39 // pred_fallthru
          _
      $region40: #{residual_block_forward.1} parent=5 // pred_fallthru
        _
      %p1899 = scmp.le.s32.totalorder 2, %s14
      // Predicated region
      $region53: #{residual_block_forward.1} parent=5 // pred_check
        %p1900 = pneg %p1899
      $region54: #{residual_block_forward.1} parent=5 // pred_check_branch
        %1902 = sbr.rel (%p1900) target = $region56
      $region55: #{residual_block_forward.1} parent=5 // pred_region
        %s1903 = ssub.s32 %s14, 2
        // Predicated region
        $region57: #{residual_block_forward.1} parent=55 // pred_check
          %p1904 = pneg %p185
        $region58: #{residual_block_forward.1} parent=55 // pred_check_branch
          %1906 = sbr.rel (%p1904) target = $region60
        $region59: #{residual_block_forward.1} parent=55 // pred_region
          %s1907 = sand.u32 %s170, 1
          %s1908 = scalar_lea.sflag [#allocation5], %s1907
          %s1909 = sand.u32 %s170, 1
          %s1910 = smul.addr %s1909, 64
          %s1911 = scalar_lea.vmem [#allocation4], %s1910
          %1912 = dma.done %s1908, 1024
        $region60: #{residual_block_forward.1} parent=55 // pred_fallthru
          _
      $region56: #{residual_block_forward.1} parent=5 // pred_fallthru
        _
    $region6: #{residual_block_forward.1} parent=1 // loop_footer
      %s18 = sadd.s32 1, %s14
    $region7: #{residual_block_forward.1} parent=1 // loop_footer_branch
      %13 = sbr.rel target = $region3
    $region8: #{residual_block_forward.1} parent=1 // loop_exit
      _
    %1913 = vsyncpa [#allocation5], 1
    %s1914 = scalar_lea.sflag [#allocation5], 1
    %1915 = vsyncpa %s1914, 1

</llo_original>
